<compile_context>
chip_gen: v7x
topology: tpu7x:2x2x1
jax: 0.10.0
libtpu: 0.0.40
codegen_flags: <defaults>
</compile_context>

<pallas_src>
import jax
import jax.numpy as jnp
from jax.experimental import pallas as pl
from jax.experimental.pallas import tpu as pltpu


def _round_up(x, m):
    return ((x + m - 1) // m) * m


def _pick_tile(total, candidates):
    for t in candidates:
        if total % t == 0:
            return t
    return total


# ---------------------------------------------------------------------------
# Pallas kernels
# ---------------------------------------------------------------------------
def _conv_relu_pool_kernel(p00_ref, p01_ref, p10_ref, p11_ref, w_ref, b_ref,
                           o_ref):
    """Fused conv-as-GEMM + bias + ReLU + 2x2 max-pool epilogue.

    p**:  [K, TM]    stride-2 im2col patches for pooling offset (py, px)
    w:    [Cout, K]  reshaped conv weight
    b:    [Cout, 1]  bias (broadcast over lanes)
    o:    [Cout, TM] pooled, activated output tile (lane-dense)
    """
    w = w_ref[...]
    b = b_ref[...]

    def branch(p_ref):
        acc = jnp.dot(w, p_ref[...], preferred_element_type=jnp.float32)
        return jnp.maximum(acc + b, 0.0)

    o_ref[...] = jnp.maximum(
        jnp.maximum(branch(p00_ref), branch(p01_ref)),
        jnp.maximum(branch(p10_ref), branch(p11_ref)),
    ).astype(o_ref.dtype)


def _mlp_kernel(x_ref, w1_ref, b1_ref, w2_ref, b2_ref, o_ref):
    """Fused fc1 -> fc2 (no activation in between, matching the PyTorch forward)."""
    h = jnp.dot(x_ref[...], w1_ref[...],
                preferred_element_type=jnp.float32) + b1_ref[...]
    o_ref[...] = (jnp.dot(h, w2_ref[...],
                          preferred_element_type=jnp.float32)
                  + b2_ref[...]).astype(o_ref.dtype)


# ---------------------------------------------------------------------------
# Pallas wrappers
# ---------------------------------------------------------------------------
def conv_relu_pool(x_cbhw, w2d, b2d, *, kh, kw, pad):
    """Conv2d(stride=1, padding=pad) + ReLU + MaxPool2d(2,2), fused.

    x_cbhw: [Cin, B, H, W]  activation, channel-major layout
    w2d:    [Cout, Cin*kh*kw]
    b2d:    [Cout, 1]
    returns [Cout, B, H//2, W//2]
    """
    Cin, B, H, W = x_cbhw.shape
    Cout, K = w2d.shape
    Ho, Wo = H // 2, W // 2
    M = B * Ho * Wo

    xp = jnp.pad(x_cbhw, ((0, 0), (0, 0), (pad, pad), (pad, pad)))

    Mpad = _round_up(M, 128)
    TM = _pick_tile(Mpad, (1024, 512, 256, 128))

    def patches(py, px):
        # Transposed, stride-2 im2col: row k = (c, di, dj), col m = (b, ho, wo).
        # (c, di, dj) ordering matches torch_weight.reshape(Cout, Cin*kh*kw).
        rows = []
        for c in range(Cin):
            for di in range(kh):
                for dj in range(kw):
                    ys = py + di
                    xs = px + dj
                    s = xp[c, :, ys:ys + 2 * Ho - 1:2, xs:xs + 2 * Wo - 1:2]
                    rows.append(s.reshape(M))
        p = jnp.stack(rows, axis=0)                    # [K, M]
        return jnp.pad(p, ((0, 0), (0, Mpad - M)))     # [K, Mpad]

    p00, p01, p10, p11 = (patches(py, px) for py in (0, 1) for px in (0, 1))

    flops = 4 * 2 * Cout * K * Mpad + 8 * Cout * Mpad
    bytes_accessed = (4 * K * Mpad + Cout * Mpad + Cout * K + Cout) * 4

    out = pl.pallas_call(
        _conv_relu_pool_kernel,
        out_shape=jax.ShapeDtypeStruct((Cout, Mpad), jnp.float32),
        grid=(Mpad // TM,),
        in_specs=[pl.BlockSpec((K, TM), lambda i: (0, i))] * 4 + [
            pl.BlockSpec((Cout, K), lambda i: (0, 0)),
            pl.BlockSpec((Cout, 1), lambda i: (0, 0)),
        ],
        out_specs=pl.BlockSpec((Cout, TM), lambda i: (0, i)),
        compiler_params=pltpu.CompilerParams(
            dimension_semantics=("parallel",),
            vmem_limit_bytes=32 * 1024 * 1024,
        ),
        cost_estimate=pl.CostEstimate(
            flops=flops, transcendentals=0, bytes_accessed=bytes_accessed),
    )(p00, p01, p10, p11, w2d, b2d)

    return out[:, :M].reshape(Cout, B, Ho, Wo)


def mlp(x, w1, b1, w2, b2, n_out):
    """Fused ((x @ w1 + b1) @ w2 + b2)[:, :n_out] in one Pallas call."""
    B, K1 = x.shape
    N1 = w1.shape[1]
    N2 = w2.shape[1]

    Bpad = _round_up(B, 8)                       # sublane-align the batch
    TB = _pick_tile(Bpad, (256, 128, 64, 32, 16, 8))
    xpad = jnp.pad(x, ((0, Bpad - B), (0, 0)))

    out = pl.pallas_call(
        _mlp_kernel,
        out_shape=jax.ShapeDtypeStruct((Bpad, N2), jnp.float32),
        grid=(Bpad // TB,),
        in_specs=[
            pl.BlockSpec((TB, K1), lambda i: (i, 0)),
            pl.BlockSpec((K1, N1), lambda i: (0, 0)),
            pl.BlockSpec((1, N1), lambda i: (0, 0)),
            pl.BlockSpec((N1, N2), lambda i: (0, 0)),
            pl.BlockSpec((1, N2), lambda i: (0, 0)),
        ],
        out_specs=pl.BlockSpec((TB, N2), lambda i: (i, 0)),
        compiler_params=pltpu.CompilerParams(
            dimension_semantics=("parallel",),
            vmem_limit_bytes=32 * 1024 * 1024,
        ),
    )(xpad, w1, b1, w2, b2)
    return out[:B, :n_out]


# ---------------------------------------------------------------------------
# Parameters (PyTorch shapes) and one-time kernel-ready layout prep
# ---------------------------------------------------------------------------
def init_params(key):
    ks = jax.random.split(key, 8)
    scale = 0.05
    return {
        "conv1_w": jax.random.normal(ks[0], (8, 1, 5, 5), jnp.float32) * scale,
        "conv1_b": jax.random.normal(ks[1], (8,), jnp.float32) * scale,
        "conv2_w": jax.random.normal(ks[2], (16, 8, 3, 3), jnp.float32) * scale,
        "conv2_b": jax.random.normal(ks[3], (16,), jnp.float32) * scale,
        "fc1_w": jax.random.normal(ks[4], (128, 16 * 7 * 7), jnp.float32) * scale,
        "fc1_b": jax.random.normal(ks[5], (128,), jnp.float32) * scale,
        "fc2_w": jax.random.normal(ks[6], (10, 128), jnp.float32) * scale,
        "fc2_b": jax.random.normal(ks[7], (10,), jnp.float32) * scale,
    }


def prepare_params(params):
    """Reshape / transpose / pad weights into kernel-ready layouts ONCE,
    outside the jitted forward (removes per-step XLA transposes)."""
    c1w, c2w = params["conv1_w"], params["conv2_w"]
    f1w, f2w = params["fc1_w"], params["fc2_w"]
    n_cls = f2w.shape[0]                      # 10
    n_pad = _round_up(n_cls, 128)             # pad fc2 output lanes to 128
    return {
        "conv1_w": c1w.reshape(c1w.shape[0], -1),              # [8, 25]
        "conv1_b": params["conv1_b"].reshape(-1, 1),            # [8, 1]
        "conv2_w": c2w.reshape(c2w.shape[0], -1),               # [16, 72]
        "conv2_b": params["conv2_b"].reshape(-1, 1),             # [16, 1]
        "fc1_w": f1w.T,                                          # [784, 128]
        "fc1_b": params["fc1_b"].reshape(1, -1),                 # [1, 128]
        "fc2_w": jnp.pad(f2w.T, ((0, 0), (0, n_pad - n_cls))),   # [128, 128]
        "fc2_b": jnp.pad(params["fc2_b"], (0, n_pad - n_cls)).reshape(1, -1),
    }


# ---------------------------------------------------------------------------
# Forward pass (mirrors ConvNet.forward)
# ---------------------------------------------------------------------------
def convnet_forward(kp, x):
    """x: [B, 1, 28, 28] NCHW float32 -> logits [B, 10]."""
    B = x.shape[0]

    # conv1: Conv2d(1, 8, k=5, p=2) + ReLU + MaxPool2d(2, 2) -> [8, B, 14, 14]
    h = conv_relu_pool(jnp.transpose(x, (1, 0, 2, 3)),
                       kp["conv1_w"], kp["conv1_b"], kh=5, kw=5, pad=2)

    # conv2: Conv2d(8, 16, k=3, p=1) + ReLU + MaxPool2d(2, 2) -> [16, B, 7, 7]
    h = conv_relu_pool(h, kp["conv2_w"], kp["conv2_b"], kh=3, kw=3, pad=1)

    # flatten in NCHW (c, h, w) order, exactly like x.view(B, -1) in PyTorch
    flat = jnp.transpose(h, (1, 0, 2, 3)).reshape(B, -1)        # [B, 784]

    # fused fc1 -> fc2 (no activation in between, per the PyTorch forward)
    return mlp(flat, kp["fc1_w"], kp["fc1_b"], kp["fc2_w"], kp["fc2_b"], 10)


if __name__ == "__main__":
    key = jax.random.PRNGKey(0)
    pkey, xkey = jax.random.split(key)
    params = init_params(pkey)
    kparams = prepare_params(params)     # one-time layout prep, outside jit

    # fc1 expects 16*7*7 features -> 28x28 single-channel input (MNIST shape).
    x = jax.random.normal(xkey, (2, 1, 28, 28), dtype=jnp.float32)

    fwd = jax.jit(convnet_forward)
    logits = fwd(kparams, x)
    jax.block_until_ready(logits)

    assert logits.shape == (2, 10) and logits.dtype == jnp.float32
    print("KERNEL_OK")
</pallas_src>

<mosaic_0001>
module attributes {stable_mosaic.version = 11 : i64} {
  func.func @_conv_relu_pool_kernel(%arg0: i32, %arg1: memref<25x512xf32, #tpu.memory_space<vmem>>, %arg2: memref<25x512xf32, #tpu.memory_space<vmem>>, %arg3: memref<25x512xf32, #tpu.memory_space<vmem>>, %arg4: memref<25x512xf32, #tpu.memory_space<vmem>>, %arg5: memref<8x25xf32, #tpu.memory_space<vmem>>, %arg6: memref<8x1xf32, #tpu.memory_space<vmem>>, %arg7: memref<8x512xf32, #tpu.memory_space<vmem>>) attributes {dimension_semantics = [#tpu.dimension_semantics<parallel>], iteration_bounds = array<i64: 1>, scalar_prefetch = 0 : i64, scratch_operands = 0 : i64, tpu.core_type = #tpu.core_type<tc>, window_params = [{transform_indices = @transform_0, window_bounds = array<i64: 25, 512>}, {transform_indices = @transform_1, window_bounds = array<i64: 25, 512>}, {transform_indices = @transform_2, window_bounds = array<i64: 25, 512>}, {transform_indices = @transform_3, window_bounds = array<i64: 25, 512>}, {pipeline_mode = #tpu.pipeline_mode<synchronous>, transform_indices = @transform_4, window_bounds = array<i64: 8, 25>}, {pipeline_mode = #tpu.pipeline_mode<synchronous>, transform_indices = @transform_5, window_bounds = array<i64: 8, 1>}, {transform_indices = @transform_6, window_bounds = array<i64: 8, 512>}]} {
    %c0 = arith.constant 0 : index
    %c0_0 = arith.constant 0 : index
    %0 = vector.load %arg5[%c0, %c0_0] : memref<8x25xf32, #tpu.memory_space<vmem>>, vector<8x25xf32>
    %c0_1 = arith.constant 0 : index
    %c0_2 = arith.constant 0 : index
    %1 = vector.load %arg6[%c0_1, %c0_2] : memref<8x1xf32, #tpu.memory_space<vmem>>, vector<8x1xf32>
    %c0_3 = arith.constant 0 : index
    %c0_4 = arith.constant 0 : index
    %2 = vector.load %arg1[%c0_3, %c0_4] : memref<25x512xf32, #tpu.memory_space<vmem>>, vector<25x512xf32>
    %cst = arith.constant dense<0.000000e+00> : vector<8x512xf32>
    %3 = tpu.matmul %0, %2, %cst {dimension_numbers = #tpu.dot_dimension_numbers<[1], [0], [0], [1], [0, 0, 1, 1], [], []>} : vector<8x25xf32>, vector<25x512xf32>, vector<8x512xf32> -> vector<8x512xf32>
    %4 = vector.broadcast %1 : vector<8x1xf32> to vector<8x512xf32>
    %5 = arith.addf %3, %4 : vector<8x512xf32>
    %cst_5 = arith.constant 0.000000e+00 : f32
    %6 = vector.broadcast %cst_5 : f32 to vector<8x512xf32>
    %7 = arith.maximumf %5, %6 : vector<8x512xf32>
    %c0_6 = arith.constant 0 : index
    %c0_7 = arith.constant 0 : index
    %8 = vector.load %arg2[%c0_6, %c0_7] : memref<25x512xf32, #tpu.memory_space<vmem>>, vector<25x512xf32>
    %cst_8 = arith.constant dense<0.000000e+00> : vector<8x512xf32>
    %9 = tpu.matmul %0, %8, %cst_8 {dimension_numbers = #tpu.dot_dimension_numbers<[1], [0], [0], [1], [0, 0, 1, 1], [], []>} : vector<8x25xf32>, vector<25x512xf32>, vector<8x512xf32> -> vector<8x512xf32>
    %10 = vector.broadcast %1 : vector<8x1xf32> to vector<8x512xf32>
    %11 = arith.addf %9, %10 : vector<8x512xf32>
    %cst_9 = arith.constant 0.000000e+00 : f32
    %12 = vector.broadcast %cst_9 : f32 to vector<8x512xf32>
    %13 = arith.maximumf %11, %12 : vector<8x512xf32>
    %14 = arith.maximumf %7, %13 : vector<8x512xf32>
    %c0_10 = arith.constant 0 : index
    %c0_11 = arith.constant 0 : index
    %15 = vector.load %arg3[%c0_10, %c0_11] : memref<25x512xf32, #tpu.memory_space<vmem>>, vector<25x512xf32>
    %cst_12 = arith.constant dense<0.000000e+00> : vector<8x512xf32>
    %16 = tpu.matmul %0, %15, %cst_12 {dimension_numbers = #tpu.dot_dimension_numbers<[1], [0], [0], [1], [0, 0, 1, 1], [], []>} : vector<8x25xf32>, vector<25x512xf32>, vector<8x512xf32> -> vector<8x512xf32>
    %17 = vector.broadcast %1 : vector<8x1xf32> to vector<8x512xf32>
    %18 = arith.addf %16, %17 : vector<8x512xf32>
    %cst_13 = arith.constant 0.000000e+00 : f32
    %19 = vector.broadcast %cst_13 : f32 to vector<8x512xf32>
    %20 = arith.maximumf %18, %19 : vector<8x512xf32>
    %c0_14 = arith.constant 0 : index
    %c0_15 = arith.constant 0 : index
    %21 = vector.load %arg4[%c0_14, %c0_15] : memref<25x512xf32, #tpu.memory_space<vmem>>, vector<25x512xf32>
    %cst_16 = arith.constant dense<0.000000e+00> : vector<8x512xf32>
    %22 = tpu.matmul %0, %21, %cst_16 {dimension_numbers = #tpu.dot_dimension_numbers<[1], [0], [0], [1], [0, 0, 1, 1], [], []>} : vector<8x25xf32>, vector<25x512xf32>, vector<8x512xf32> -> vector<8x512xf32>
    %23 = vector.broadcast %1 : vector<8x1xf32> to vector<8x512xf32>
    %24 = arith.addf %22, %23 : vector<8x512xf32>
    %cst_17 = arith.constant 0.000000e+00 : f32
    %25 = vector.broadcast %cst_17 : f32 to vector<8x512xf32>
    %26 = arith.maximumf %24, %25 : vector<8x512xf32>
    %27 = arith.maximumf %20, %26 : vector<8x512xf32>
    %28 = arith.maximumf %14, %27 : vector<8x512xf32>
    %c0_18 = arith.constant 0 : index
    %c0_19 = arith.constant 0 : index
    %29 = vector.load %arg7[%c0_18, %c0_19] : memref<8x512xf32, #tpu.memory_space<vmem>>, vector<8x512xf32>
    tpu.vector_store %arg7[%c0_18, %c0_19], %28 {strides = array<i32>} : memref<8x512xf32, #tpu.memory_space<vmem>>, vector<8x512xf32>,
    return
  }
  func.func @transform_0(%arg0: i32) -> (i32, i32) {
    %c0_i32 = arith.constant 0 : i32
    %c0_i32_0 = arith.constant 0 : i32
    return %c0_i32, %arg0 : i32, i32
  }
  func.func @transform_1(%arg0: i32) -> (i32, i32) {
    %c0_i32 = arith.constant 0 : i32
    %c0_i32_0 = arith.constant 0 : i32
    return %c0_i32, %arg0 : i32, i32
  }
  func.func @transform_2(%arg0: i32) -> (i32, i32) {
    %c0_i32 = arith.constant 0 : i32
    %c0_i32_0 = arith.constant 0 : i32
    return %c0_i32, %arg0 : i32, i32
  }
  func.func @transform_3(%arg0: i32) -> (i32, i32) {
    %c0_i32 = arith.constant 0 : i32
    %c0_i32_0 = arith.constant 0 : i32
    return %c0_i32, %arg0 : i32, i32
  }
  func.func @transform_4(%arg0: i32) -> (i32, i32) {
    %c0_i32 = arith.constant 0 : i32
    %c0_i32_0 = arith.constant 0 : i32
    %c0_i32_1 = arith.constant 0 : i32
    return %c0_i32, %c0_i32_0 : i32, i32
  }
  func.func @transform_5(%arg0: i32) -> (i32, i32) {
    %c0_i32 = arith.constant 0 : i32
    %c0_i32_0 = arith.constant 0 : i32
    %c0_i32_1 = arith.constant 0 : i32
    return %c0_i32, %c0_i32_0 : i32, i32
  }
  func.func @transform_6(%arg0: i32) -> (i32, i32) {
    %c0_i32 = arith.constant 0 : i32
    %c0_i32_0 = arith.constant 0 : i32
    return %c0_i32, %arg0 : i32, i32
  }
}

module attributes {stable_mosaic.version = 11 : i64} {
  func.func @_mlp_kernel(%arg0: i32, %arg1: memref<8x784xf32, #tpu.memory_space<vmem>>, %arg2: memref<784x128xf32, #tpu.memory_space<vmem>>, %arg3: memref<1x128xf32, #tpu.memory_space<vmem>>, %arg4: memref<128x128xf32, #tpu.memory_space<vmem>>, %arg5: memref<1x128xf32, #tpu.memory_space<vmem>>, %arg6: memref<8x128xf32, #tpu.memory_space<vmem>>) attributes {dimension_semantics = [#tpu.dimension_semantics<parallel>], iteration_bounds = array<i64: 1>, scalar_prefetch = 0 : i64, scratch_operands = 0 : i64, tpu.core_type = #tpu.core_type<tc>, window_params = [{transform_indices = @transform_0, window_bounds = array<i64: 8, 784>}, {pipeline_mode = #tpu.pipeline_mode<synchronous>, transform_indices = @transform_1, window_bounds = array<i64: 784, 128>}, {pipeline_mode = #tpu.pipeline_mode<synchronous>, transform_indices = @transform_2, window_bounds = array<i64: 1, 128>}, {pipeline_mode = #tpu.pipeline_mode<synchronous>, transform_indices = @transform_3, window_bounds = array<i64: 128, 128>}, {pipeline_mode = #tpu.pipeline_mode<synchronous>, transform_indices = @transform_4, window_bounds = array<i64: 1, 128>}, {transform_indices = @transform_5, window_bounds = array<i64: 8, 128>}]} {
    %c0 = arith.constant 0 : index
    %c0_0 = arith.constant 0 : index
    %0 = vector.load %arg1[%c0, %c0_0] : memref<8x784xf32, #tpu.memory_space<vmem>>, vector<8x784xf32>
    %c0_1 = arith.constant 0 : index
    %c0_2 = arith.constant 0 : index
    %1 = vector.load %arg2[%c0_1, %c0_2] : memref<784x128xf32, #tpu.memory_space<vmem>>, vector<784x128xf32>
    %cst = arith.constant dense<0.000000e+00> : vector<8x128xf32>
    %2 = tpu.matmul %0, %1, %cst {dimension_numbers = #tpu.dot_dimension_numbers<[1], [0], [0], [1], [0, 0, 1, 1], [], []>} : vector<8x784xf32>, vector<784x128xf32>, vector<8x128xf32> -> vector<8x128xf32>
    %c0_3 = arith.constant 0 : index
    %c0_4 = arith.constant 0 : index
    %3 = vector.load %arg3[%c0_3, %c0_4] : memref<1x128xf32, #tpu.memory_space<vmem>>, vector<1x128xf32>
    %4 = vector.broadcast %3 : vector<1x128xf32> to vector<8x128xf32>
    %5 = arith.addf %2, %4 : vector<8x128xf32>
    %c0_5 = arith.constant 0 : index
    %c0_6 = arith.constant 0 : index
    %6 = vector.load %arg4[%c0_5, %c0_6] : memref<128x128xf32, #tpu.memory_space<vmem>>, vector<128x128xf32>
    %cst_7 = arith.constant dense<0.000000e+00> : vector<8x128xf32>
    %7 = tpu.matmul %5, %6, %cst_7 {dimension_numbers = #tpu.dot_dimension_numbers<[1], [0], [0], [1], [0, 0, 1, 1], [], []>} : vector<8x128xf32>, vector<128x128xf32>, vector<8x128xf32> -> vector<8x128xf32>
    %c0_8 = arith.constant 0 : index
    %c0_9 = arith.constant 0 : index
    %8 = vector.load %arg5[%c0_8, %c0_9] : memref<1x128xf32, #tpu.memory_space<vmem>>, vector<1x128xf32>
    %9 = vector.broadcast %8 : vector<1x128xf32> to vector<8x128xf32>
    %10 = arith.addf %7, %9 : vector<8x128xf32>
    %c0_10 = arith.constant 0 : index
    %c0_11 = arith.constant 0 : index
    %11 = vector.load %arg6[%c0_10, %c0_11] : memref<8x128xf32, #tpu.memory_space<vmem>>, vector<8x128xf32>
    tpu.vector_store %arg6[%c0_10, %c0_11], %10 {strides = array<i32>} : memref<8x128xf32, #tpu.memory_space<vmem>>, vector<8x128xf32>,
    return
  }
  func.func @transform_0(%arg0: i32) -> (i32, i32) {
    %c0_i32 = arith.constant 0 : i32
    %c0_i32_0 = arith.constant 0 : i32
    return %arg0, %c0_i32 : i32, i32
  }
  func.func @transform_1(%arg0: i32) -> (i32, i32) {
    %c0_i32 = arith.constant 0 : i32
    %c0_i32_0 = arith.constant 0 : i32
    %c0_i32_1 = arith.constant 0 : i32
    return %c0_i32, %c0_i32_0 : i32, i32
  }
  func.func @transform_2(%arg0: i32) -> (i32, i32) {
    %c0_i32 = arith.constant 0 : i32
    %c0_i32_0 = arith.constant 0 : i32
    %c0_i32_1 = arith.constant 0 : i32
    return %c0_i32, %c0_i32_0 : i32, i32
  }
  func.func @transform_3(%arg0: i32) -> (i32, i32) {
    %c0_i32 = arith.constant 0 : i32
    %c0_i32_0 = arith.constant 0 : i32
    %c0_i32_1 = arith.constant 0 : i32
    return %c0_i32, %c0_i32_0 : i32, i32
  }
  func.func @transform_4(%arg0: i32) -> (i32, i32) {
    %c0_i32 = arith.constant 0 : i32
    %c0_i32_0 = arith.constant 0 : i32
    %c0_i32_1 = arith.constant 0 : i32
    return %c0_i32, %c0_i32_0 : i32, i32
  }
  func.func @transform_5(%arg0: i32) -> (i32, i32) {
    %c0_i32 = arith.constant 0 : i32
    %c0_i32_0 = arith.constant 0 : i32
    return %arg0, %c0_i32 : i32, i32
  }
}

module attributes {stable_mosaic.version = 11 : i64} {
  func.func @_conv_relu_pool_kernel(%arg0: i32, %arg1: memref<72x128xf32, #tpu.memory_space<vmem>>, %arg2: memref<72x128xf32, #tpu.memory_space<vmem>>, %arg3: memref<72x128xf32, #tpu.memory_space<vmem>>, %arg4: memref<72x128xf32, #tpu.memory_space<vmem>>, %arg5: memref<16x72xf32, #tpu.memory_space<vmem>>, %arg6: memref<16x1xf32, #tpu.memory_space<vmem>>, %arg7: memref<16x128xf32, #tpu.memory_space<vmem>>) attributes {dimension_semantics = [#tpu.dimension_semantics<parallel>], iteration_bounds = array<i64: 1>, scalar_prefetch = 0 : i64, scratch_operands = 0 : i64, tpu.core_type = #tpu.core_type<tc>, window_params = [{transform_indices = @transform_0, window_bounds = array<i64: 72, 128>}, {transform_indices = @transform_1, window_bounds = array<i64: 72, 128>}, {transform_indices = @transform_2, window_bounds = array<i64: 72, 128>}, {transform_indices = @transform_3, window_bounds = array<i64: 72, 128>}, {pipeline_mode = #tpu.pipeline_mode<synchronous>, transform_indices = @transform_4, window_bounds = array<i64: 16, 72>}, {pipeline_mode = #tpu.pipeline_mode<synchronous>, transform_indices = @transform_5, window_bounds = array<i64: 16, 1>}, {transform_indices = @transform_6, window_bounds = array<i64: 16, 128>}]} {
    %c0 = arith.constant 0 : index
    %c0_0 = arith.constant 0 : index
    %0 = vector.load %arg5[%c0, %c0_0] : memref<16x72xf32, #tpu.memory_space<vmem>>, vector<16x72xf32>
    %c0_1 = arith.constant 0 : index
    %c0_2 = arith.constant 0 : index
    %1 = vector.load %arg6[%c0_1, %c0_2] : memref<16x1xf32, #tpu.memory_space<vmem>>, vector<16x1xf32>
    %c0_3 = arith.constant 0 : index
    %c0_4 = arith.constant 0 : index
    %2 = vector.load %arg1[%c0_3, %c0_4] : memref<72x128xf32, #tpu.memory_space<vmem>>, vector<72x128xf32>
    %cst = arith.constant dense<0.000000e+00> : vector<16x128xf32>
    %3 = tpu.matmul %0, %2, %cst {dimension_numbers = #tpu.dot_dimension_numbers<[1], [0], [0], [1], [0, 0, 1, 1], [], []>} : vector<16x72xf32>, vector<72x128xf32>, vector<16x128xf32> -> vector<16x128xf32>
    %4 = vector.broadcast %1 : vector<16x1xf32> to vector<16x128xf32>
    %5 = arith.addf %3, %4 : vector<16x128xf32>
    %cst_5 = arith.constant 0.000000e+00 : f32
    %6 = vector.broadcast %cst_5 : f32 to vector<16x128xf32>
    %7 = arith.maximumf %5, %6 : vector<16x128xf32>
    %c0_6 = arith.constant 0 : index
    %c0_7 = arith.constant 0 : index
    %8 = vector.load %arg2[%c0_6, %c0_7] : memref<72x128xf32, #tpu.memory_space<vmem>>, vector<72x128xf32>
    %cst_8 = arith.constant dense<0.000000e+00> : vector<16x128xf32>
    %9 = tpu.matmul %0, %8, %cst_8 {dimension_numbers = #tpu.dot_dimension_numbers<[1], [0], [0], [1], [0, 0, 1, 1], [], []>} : vector<16x72xf32>, vector<72x128xf32>, vector<16x128xf32> -> vector<16x128xf32>
    %10 = vector.broadcast %1 : vector<16x1xf32> to vector<16x128xf32>
    %11 = arith.addf %9, %10 : vector<16x128xf32>
    %cst_9 = arith.constant 0.000000e+00 : f32
    %12 = vector.broadcast %cst_9 : f32 to vector<16x128xf32>
    %13 = arith.maximumf %11, %12 : vector<16x128xf32>
    %14 = arith.maximumf %7, %13 : vector<16x128xf32>
    %c0_10 = arith.constant 0 : index
    %c0_11 = arith.constant 0 : index
    %15 = vector.load %arg3[%c0_10, %c0_11] : memref<72x128xf32, #tpu.memory_space<vmem>>, vector<72x128xf32>
    %cst_12 = arith.constant dense<0.000000e+00> : vector<16x128xf32>
    %16 = tpu.matmul %0, %15, %cst_12 {dimension_numbers = #tpu.dot_dimension_numbers<[1], [0], [0], [1], [0, 0, 1, 1], [], []>} : vector<16x72xf32>, vector<72x128xf32>, vector<16x128xf32> -> vector<16x128xf32>
    %17 = vector.broadcast %1 : vector<16x1xf32> to vector<16x128xf32>
    %18 = arith.addf %16, %17 : vector<16x128xf32>
    %cst_13 = arith.constant 0.000000e+00 : f32
    %19 = vector.broadcast %cst_13 : f32 to vector<16x128xf32>
    %20 = arith.maximumf %18, %19 : vector<16x128xf32>
    %c0_14 = arith.constant 0 : index
    %c0_15 = arith.constant 0 : index
    %21 = vector.load %arg4[%c0_14, %c0_15] : memref<72x128xf32, #tpu.memory_space<vmem>>, vector<72x128xf32>
    %cst_16 = arith.constant dense<0.000000e+00> : vector<16x128xf32>
    %22 = tpu.matmul %0, %21, %cst_16 {dimension_numbers = #tpu.dot_dimension_numbers<[1], [0], [0], [1], [0, 0, 1, 1], [], []>} : vector<16x72xf32>, vector<72x128xf32>, vector<16x128xf32> -> vector<16x128xf32>
    %23 = vector.broadcast %1 : vector<16x1xf32> to vector<16x128xf32>
    %24 = arith.addf %22, %23 : vector<16x128xf32>
    %cst_17 = arith.constant 0.000000e+00 : f32
    %25 = vector.broadcast %cst_17 : f32 to vector<16x128xf32>
    %26 = arith.maximumf %24, %25 : vector<16x128xf32>
    %27 = arith.maximumf %20, %26 : vector<16x128xf32>
    %28 = arith.maximumf %14, %27 : vector<16x128xf32>
    %c0_18 = arith.constant 0 : index
    %c0_19 = arith.constant 0 : index
    %29 = vector.load %arg7[%c0_18, %c0_19] : memref<16x128xf32, #tpu.memory_space<vmem>>, vector<16x128xf32>
    tpu.vector_store %arg7[%c0_18, %c0_19], %28 {strides = array<i32>} : memref<16x128xf32, #tpu.memory_space<vmem>>, vector<16x128xf32>,
    return
  }
  func.func @transform_0(%arg0: i32) -> (i32, i32) {
    %c0_i32 = arith.constant 0 : i32
    %c0_i32_0 = arith.constant 0 : i32
    return %c0_i32, %arg0 : i32, i32
  }
  func.func @transform_1(%arg0: i32) -> (i32, i32) {
    %c0_i32 = arith.constant 0 : i32
    %c0_i32_0 = arith.constant 0 : i32
    return %c0_i32, %arg0 : i32, i32
  }
  func.func @transform_2(%arg0: i32) -> (i32, i32) {
    %c0_i32 = arith.constant 0 : i32
    %c0_i32_0 = arith.constant 0 : i32
    return %c0_i32, %arg0 : i32, i32
  }
  func.func @transform_3(%arg0: i32) -> (i32, i32) {
    %c0_i32 = arith.constant 0 : i32
    %c0_i32_0 = arith.constant 0 : i32
    return %c0_i32, %arg0 : i32, i32
  }
  func.func @transform_4(%arg0: i32) -> (i32, i32) {
    %c0_i32 = arith.constant 0 : i32
    %c0_i32_0 = arith.constant 0 : i32
    %c0_i32_1 = arith.constant 0 : i32
    return %c0_i32, %c0_i32_0 : i32, i32
  }
  func.func @transform_5(%arg0: i32) -> (i32, i32) {
    %c0_i32 = arith.constant 0 : i32
    %c0_i32_0 = arith.constant 0 : i32
    %c0_i32_1 = arith.constant 0 : i32
    return %c0_i32, %c0_i32_0 : i32, i32
  }
  func.func @transform_6(%arg0: i32) -> (i32, i32) {
    %c0_i32 = arith.constant 0 : i32
    %c0_i32_0 = arith.constant 0 : i32
    return %c0_i32, %arg0 : i32, i32
  }
}

</mosaic_0001>

<llo_original>
// kernel: squeeze.462
$region0: #{squeeze.462}
  %s0 = inlined_call_operand.vmem [shape: f32[2,14,14], index: 0, kind: input, shape index: {}]
  %s1 = inlined_call_operand.vmem [shape: f32[1,392], index: 1, kind: output, shape index: {}]
  $region1: #{squeeze.462} parent=0
    #allocation0 [shape = 'u8[16384]{0}', space=vmem, size = 0x4000, scoped, tag = 'scoped mem for output reshape']
    %v2 = vld [vmem:[%s0] sm:$0x1]
    %vm3 = vcmask 113664
    %4 = vst.msk [vmem:[#allocation0] sm:$0x1] %vm3, %v2
    %s5 = scalar_lea.vmem %s0, 9
    %v6 = vld [vmem:[%s5] sm:$0x1]
    %s7 = scalar_lea.vmem %s0, 9
    %v8 = vld [vmem:[%s7] sm:$0x1]
    %vm9 = vcmask 15360
    %v10 = vsel %vm9, %v8, %v6
    %11 = vrot.lane.b32.xlu0 %v10, 126
    %v12 = vpop.permute.xlu0 %11
    %vm13 = vcmask 97280
    %s14 = scalar_lea.vmem [#allocation0], 8
    %15 = vst.msk [vmem:[%s14] sm:$0x1] %vm13, %v12
    %vm16 = vcmask 1048560
    %17 = vst.msk [vmem:[#allocation0] sm:$0x1] %vm16, %v12
    %s18 = scalar_lea.vmem %s0, 20
    %v19 = vld [vmem:[%s18] sm:$0x1]
    %s20 = scalar_lea.vmem %s0, 20
    %v21 = vld [vmem:[%s20] sm:$0x1]
    %vm22 = vcmask 31744
    %v23 = vsel %vm22, %v21, %v19
    %24 = vrot.lane.b32.xlu0 %v23, 124
    %v25 = vpop.permute.xlu0 %24
    %vm26 = vcmask 80896
    %s27 = scalar_lea.vmem [#allocation0], 16
    %28 = vst.msk [vmem:[%s27] sm:$0x1] %vm26, %v25
    %vm29 = vcmask 1048544
    %s30 = scalar_lea.vmem [#allocation0], 8
    %31 = vst.msk [vmem:[%s30] sm:$0x1] %vm29, %v25
    %s32 = scalar_lea.vmem %s0, 29
    %v33 = vld [vmem:[%s32] sm:$0x1]
    %s34 = scalar_lea.vmem %s0, 29
    %v35 = vld [vmem:[%s34] sm:$0x1]
    %vm36 = vcmask 48128
    %v37 = vsel %vm36, %v35, %v33
    %38 = vrot.lane.b32.xlu0 %v37, 122
    %v39 = vpop.permute.xlu0 %38
    %vm40 = vcmask 64512
    %s41 = scalar_lea.vmem [#allocation0], 24
    %42 = vst.msk [vmem:[%s41] sm:$0x1] %vm40, %v39
    %vm43 = vcmask 1048528
    %s44 = scalar_lea.vmem [#allocation0], 16
    %45 = vst.msk [vmem:[%s44] sm:$0x1] %vm43, %v39
    %s46 = scalar_lea.vmem %s0, 8
    %v47 = vld [vmem:[%s46] sm:$0x1]
    %48 = vrot.lane.b32.xlu0 %v47, 112
    %v49 = vpop.permute.xlu0 %48
    %vm50 = vcmask 1032064
    %51 = vst.msk [vmem:[#allocation0] sm:$0x1] %vm50, %v49
    %s52 = scalar_lea.vmem %s0, 19
    %v53 = vld [vmem:[%s52] sm:$0x1]
    %54 = vrot.lane.b32.xlu0 %v53, 110
    %v55 = vpop.permute.xlu0 %54
    %vm56 = vcmask 1015664
    %s57 = scalar_lea.vmem [#allocation0], 8
    %58 = vst.msk [vmem:[%s57] sm:$0x1] %vm56, %v55
    %s59 = scalar_lea.vmem %s0, 28
    %v60 = vld [vmem:[%s59] sm:$0x1]
    %61 = vrot.lane.b32.xlu0 %v60, 108
    %v62 = vpop.permute.xlu0 %61
    %vm63 = vcmask 999264
    %s64 = scalar_lea.vmem [#allocation0], 16
    %65 = vst.msk [vmem:[%s64] sm:$0x1] %vm63, %v62
    %s66 = scalar_lea.vmem %s0, 7
    %v67 = vld [vmem:[%s66] sm:$0x1]
    %68 = vrot.lane.b32.xlu0 %v67, 98
    %v69 = vpop.permute.xlu0 %68
    %vm70 = vcmask 917264
    %71 = vst.msk [vmem:[#allocation0] sm:$0x1] %vm70, %v69
    %s72 = scalar_lea.vmem %s0, 18
    %v73 = vld [vmem:[%s72] sm:$0x1]
    %74 = vrot.lane.b32.xlu0 %v73, 96
    %v75 = vpop.permute.xlu0 %74
    %vm76 = vcmask 900864
    %s77 = scalar_lea.vmem [#allocation0], 8
    %78 = vst.msk [vmem:[%s77] sm:$0x1] %vm76, %v75
    %s79 = scalar_lea.vmem %s0, 27
    %v80 = vld [vmem:[%s79] sm:$0x1]
    %81 = vrot.lane.b32.xlu0 %v80, 94
    %v82 = vpop.permute.xlu0 %81
    %vm83 = vcmask 884464
    %s84 = scalar_lea.vmem [#allocation0], 16
    %85 = vst.msk [vmem:[%s84] sm:$0x1] %vm83, %v82
    %s86 = scalar_lea.vmem %s0, 6
    %v87 = vld [vmem:[%s86] sm:$0x1]
    %88 = vrot.lane.b32.xlu0 %v87, 84
    %v89 = vpop.permute.xlu0 %88
    %vm90 = vcmask 802464
    %91 = vst.msk [vmem:[#allocation0] sm:$0x1] %vm90, %v89
    %s92 = scalar_lea.vmem %s0, 17
    %v93 = vld [vmem:[%s92] sm:$0x1]
    %94 = vrot.lane.b32.xlu0 %v93, 82
    %v95 = vpop.permute.xlu0 %94
    %vm96 = vcmask 786064
    %s97 = scalar_lea.vmem [#allocation0], 8
    %98 = vst.msk [vmem:[%s97] sm:$0x1] %vm96, %v95
    %s99 = scalar_lea.vmem %s0, 26
    %v100 = vld [vmem:[%s99] sm:$0x1]
    %101 = vrot.lane.b32.xlu0 %v100, 80
    %v102 = vpop.permute.xlu0 %101
    %vm103 = vcmask 769664
    %s104 = scalar_lea.vmem [#allocation0], 16
    %105 = vst.msk [vmem:[%s104] sm:$0x1] %vm103, %v102
    %s106 = scalar_lea.vmem %s0, 5
    %v107 = vld [vmem:[%s106] sm:$0x1]
    %108 = vrot.lane.b32.xlu0 %v107, 70
    %v109 = vpop.permute.xlu0 %108
    %vm110 = vcmask 687664
    %111 = vst.msk [vmem:[#allocation0] sm:$0x1] %vm110, %v109
    %s112 = scalar_lea.vmem %s0, 16
    %v113 = vld [vmem:[%s112] sm:$0x1]
    %114 = vrot.lane.b32.xlu0 %v113, 68
    %v115 = vpop.permute.xlu0 %114
    %vm116 = vcmask 671264
    %s117 = scalar_lea.vmem [#allocation0], 8
    %118 = vst.msk [vmem:[%s117] sm:$0x1] %vm116, %v115
    %s119 = scalar_lea.vmem %s0, 25
    %v120 = vld [vmem:[%s119] sm:$0x1]
    %121 = vrot.lane.b32.xlu0 %v120, 66
    %v122 = vpop.permute.xlu0 %121
    %vm123 = vcmask 654864
    %s124 = scalar_lea.vmem [#allocation0], 16
    %125 = vst.msk [vmem:[%s124] sm:$0x1] %vm123, %v122
    %s126 = scalar_lea.vmem %s0, 4
    %v127 = vld [vmem:[%s126] sm:$0x1]
    %128 = vrot.lane.b32.xlu0 %v127, 56
    %v129 = vpop.permute.xlu0 %128
    %vm130 = vcmask 572864
    %131 = vst.msk [vmem:[#allocation0] sm:$0x1] %vm130, %v129
    %s132 = scalar_lea.vmem %s0, 13
    %v133 = vld [vmem:[%s132] sm:$0x1]
    %134 = vrot.lane.b32.xlu0 %v133, 54
    %v135 = vpop.permute.xlu0 %134
    %vm136 = vcmask 556464
    %s137 = scalar_lea.vmem [#allocation0], 8
    %138 = vst.msk [vmem:[%s137] sm:$0x1] %vm136, %v135
    %s139 = scalar_lea.vmem %s0, 24
    %v140 = vld [vmem:[%s139] sm:$0x1]
    %141 = vrot.lane.b32.xlu0 %v140, 52
    %v142 = vpop.permute.xlu0 %141
    %vm143 = vcmask 540064
    %s144 = scalar_lea.vmem [#allocation0], 16
    %145 = vst.msk [vmem:[%s144] sm:$0x1] %vm143, %v142
    %s146 = scalar_lea.vmem %s0, 3
    %v147 = vld [vmem:[%s146] sm:$0x1]
    %148 = vrot.lane.b32.xlu0 %v147, 42
    %v149 = vpop.permute.xlu0 %148
    %vm150 = vcmask 458064
    %151 = vst.msk [vmem:[#allocation0] sm:$0x1] %vm150, %v149
    %s152 = scalar_lea.vmem %s0, 12
    %v153 = vld [vmem:[%s152] sm:$0x1]
    %154 = vrot.lane.b32.xlu0 %v153, 40
    %v155 = vpop.permute.xlu0 %154
    %vm156 = vcmask 441664
    %s157 = scalar_lea.vmem [#allocation0], 8
    %158 = vst.msk [vmem:[%s157] sm:$0x1] %vm156, %v155
    %s159 = scalar_lea.vmem %s0, 23
    %v160 = vld [vmem:[%s159] sm:$0x1]
    %161 = vrot.lane.b32.xlu0 %v160, 38
    %v162 = vpop.permute.xlu0 %161
    %vm163 = vcmask 425264
    %s164 = scalar_lea.vmem [#allocation0], 16
    %165 = vst.msk [vmem:[%s164] sm:$0x1] %vm163, %v162
    %s166 = scalar_lea.vmem %s0, 2
    %v167 = vld [vmem:[%s166] sm:$0x1]
    %168 = vrot.lane.b32.xlu0 %v167, 28
    %v169 = vpop.permute.xlu0 %168
    %vm170 = vcmask 343264
    %171 = vst.msk [vmem:[#allocation0] sm:$0x1] %vm170, %v169
    %s172 = scalar_lea.vmem %s0, 11
    %v173 = vld [vmem:[%s172] sm:$0x1]
    %174 = vrot.lane.b32.xlu0 %v173, 26
    %v175 = vpop.permute.xlu0 %174
    %vm176 = vcmask 326864
    %s177 = scalar_lea.vmem [#allocation0], 8
    %178 = vst.msk [vmem:[%s177] sm:$0x1] %vm176, %v175
    %s179 = scalar_lea.vmem %s0, 22
    %v180 = vld [vmem:[%s179] sm:$0x1]
    %181 = vrot.lane.b32.xlu0 %v180, 24
    %v182 = vpop.permute.xlu0 %181
    %vm183 = vcmask 310464
    %s184 = scalar_lea.vmem [#allocation0], 16
    %185 = vst.msk [vmem:[%s184] sm:$0x1] %vm183, %v182
    %s186 = scalar_lea.vmem %s0, 1
    %v187 = vld [vmem:[%s186] sm:$0x1]
    %188 = vrot.lane.b32.xlu0 %v187, 14
    %v189 = vpop.permute.xlu0 %188
    %vm190 = vcmask 228464
    %191 = vst.msk [vmem:[#allocation0] sm:$0x1] %vm190, %v189
    %s192 = scalar_lea.vmem %s0, 10
    %v193 = vld [vmem:[%s192] sm:$0x1]
    %194 = vrot.lane.b32.xlu0 %v193, 12
    %v195 = vpop.permute.xlu0 %194
    %vm196 = vcmask 212064
    %s197 = scalar_lea.vmem [#allocation0], 8
    %198 = vst.msk [vmem:[%s197] sm:$0x1] %vm196, %v195
    %s199 = scalar_lea.vmem %s0, 21
    %v200 = vld [vmem:[%s199] sm:$0x1]
    %201 = vrot.lane.b32.xlu0 %v200, 10
    %v202 = vpop.permute.xlu0 %201
    %vm203 = vcmask 195664
    %s204 = scalar_lea.vmem [#allocation0], 16
    %205 = vst.msk [vmem:[%s204] sm:$0x1] %vm203, %v202
    %s207 = sshllo.u32 0, 1
    %v209 = vld [vmem:[#allocation0] sm:%s207]
    %s210 = sshllo.u32 0, 1
    %211 = vst [vmem:[%s1] sm:%s210] %v209
    %s212 = scalar_lea.vmem [#allocation0], 8
    %v213 = vld [vmem:[%s212] sm:%s207]
    %s214 = sshllo.u32 0, 1
    %s215 = scalar_lea.vmem %s1, 1
    %216 = vst [vmem:[%s215] sm:%s214] %v213
    %s217 = scalar_lea.vmem [#allocation0], 16
    %v218 = vld [vmem:[%s217] sm:%s207]
    %s219 = sshllo.u32 0, 1
    %s220 = smul.addr 1, 2
    %s221 = scalar_lea.vmem %s1, %s220
    %222 = vst [vmem:[%s221] sm:%s219] %v218
    %s223 = scalar_lea.vmem [#allocation0], 24
    %v224 = vld [vmem:[%s223] sm:%s207]
    %s225 = sshllo.u32 0, 1
    %s226 = smul.addr 1, 3
    %s227 = scalar_lea.vmem %s1, %s226
    %228 = vst [vmem:[%s227] sm:%s225] %v224

// kernel: squeeze.648
$region0: #{squeeze.648}
  %s0 = inlined_call_operand.vmem [shape: f32[1,2,7,7], index: 0, kind: input, shape index: {}]
  %s1 = inlined_call_operand.vmem [shape: f32[1,98], index: 1, kind: output, shape index: {}]
  $region1: #{squeeze.648} parent=0
    #allocation0 [shape = 'u8[4096]{0}', space=vmem, size = 0x1000, scoped, tag = 'scoped mem for output reshape']
    %v2 = vld [vmem:[%s0] sm:$0x1]
    %vm3 = vcmask 56320
    %4 = vst.msk [vmem:[#allocation0] sm:$0x1] %vm3, %v2
    %s5 = scalar_lea.vmem %s0, 14
    %v6 = vld [vmem:[%s5] sm:$0x1]
    %7 = vrot.lane.b32.xlu0 %v6, 91
    %v8 = vpop.permute.xlu0 %7
    %vm9 = vcmask 802520
    %10 = vst.msk [vmem:[#allocation0] sm:$0x1] %vm9, %v8
    %s11 = scalar_lea.vmem %s0, 13
    %v12 = vld [vmem:[%s11] sm:$0x1]
    %13 = vrot.lane.b32.xlu0 %v12, 84
    %v14 = vpop.permute.xlu0 %13
    %vm15 = vcmask 745120
    %16 = vst.msk [vmem:[#allocation0] sm:$0x1] %vm15, %v14
    %s17 = scalar_lea.vmem %s0, 12
    %v18 = vld [vmem:[%s17] sm:$0x1]
    %19 = vrot.lane.b32.xlu0 %v18, 77
    %v20 = vpop.permute.xlu0 %19
    %vm21 = vcmask 687720
    %22 = vst.msk [vmem:[#allocation0] sm:$0x1] %vm21, %v20
    %s23 = scalar_lea.vmem %s0, 11
    %v24 = vld [vmem:[%s23] sm:$0x1]
    %25 = vrot.lane.b32.xlu0 %v24, 70
    %v26 = vpop.permute.xlu0 %25
    %vm27 = vcmask 630320
    %28 = vst.msk [vmem:[#allocation0] sm:$0x1] %vm27, %v26
    %s29 = scalar_lea.vmem %s0, 10
    %v30 = vld [vmem:[%s29] sm:$0x1]
    %31 = vrot.lane.b32.xlu0 %v30, 63
    %v32 = vpop.permute.xlu0 %31
    %vm33 = vcmask 572920
    %34 = vst.msk [vmem:[#allocation0] sm:$0x1] %vm33, %v32
    %s35 = scalar_lea.vmem %s0, 9
    %v36 = vld [vmem:[%s35] sm:$0x1]
    %37 = vrot.lane.b32.xlu0 %v36, 56
    %v38 = vpop.permute.xlu0 %37
    %vm39 = vcmask 515520
    %40 = vst.msk [vmem:[#allocation0] sm:$0x1] %vm39, %v38
    %s41 = scalar_lea.vmem %s0, 8
    %v42 = vld [vmem:[%s41] sm:$0x1]
    %43 = vrot.lane.b32.xlu0 %v42, 49
    %v44 = vpop.permute.xlu0 %43
    %vm45 = vcmask 458120
    %46 = vst.msk [vmem:[#allocation0] sm:$0x1] %vm45, %v44
    %s47 = scalar_lea.vmem %s0, 6
    %v48 = vld [vmem:[%s47] sm:$0x1]
    %49 = vrot.lane.b32.xlu0 %v48, 42
    %v50 = vpop.permute.xlu0 %49
    %vm51 = vcmask 400720
    %52 = vst.msk [vmem:[#allocation0] sm:$0x1] %vm51, %v50
    %s53 = scalar_lea.vmem %s0, 5
    %v54 = vld [vmem:[%s53] sm:$0x1]
    %55 = vrot.lane.b32.xlu0 %v54, 35
    %v56 = vpop.permute.xlu0 %55
    %vm57 = vcmask 343320
    %58 = vst.msk [vmem:[#allocation0] sm:$0x1] %vm57, %v56
    %s59 = scalar_lea.vmem %s0, 4
    %v60 = vld [vmem:[%s59] sm:$0x1]
    %61 = vrot.lane.b32.xlu0 %v60, 28
    %v62 = vpop.permute.xlu0 %61
    %vm63 = vcmask 285920
    %64 = vst.msk [vmem:[#allocation0] sm:$0x1] %vm63, %v62
    %s65 = scalar_lea.vmem %s0, 3
    %v66 = vld [vmem:[%s65] sm:$0x1]
    %67 = vrot.lane.b32.xlu0 %v66, 21
    %v68 = vpop.permute.xlu0 %67
    %vm69 = vcmask 228520
    %70 = vst.msk [vmem:[#allocation0] sm:$0x1] %vm69, %v68
    %s71 = scalar_lea.vmem %s0, 2
    %v72 = vld [vmem:[%s71] sm:$0x1]
    %73 = vrot.lane.b32.xlu0 %v72, 14
    %v74 = vpop.permute.xlu0 %73
    %vm75 = vcmask 171120
    %76 = vst.msk [vmem:[#allocation0] sm:$0x1] %vm75, %v74
    %s77 = scalar_lea.vmem %s0, 1
    %v78 = vld [vmem:[%s77] sm:$0x1]
    %79 = vrot.lane.b32.xlu0 %v78, 7
    %v80 = vpop.permute.xlu0 %79
    %vm81 = vcmask 113720
    %82 = vst.msk [vmem:[#allocation0] sm:$0x1] %vm81, %v80
    %s84 = sshllo.u32 0, 1
    %v86 = vld [vmem:[#allocation0] sm:%s84]
    %s87 = sshllo.u32 0, 1
    %88 = vst [vmem:[%s1] sm:%s87] %v86

// kernel: convnet_forward.3
$region0: #{convnet_forward.3}
  #allocation0 [shape = 'u32[]', space=smem, size = 0x4, offset = 0x4, fixed_abs, tag = 'smem constant byte address 0x4 - core index']
  #allocation1 [shape = 'u32[144,128]{1,0:T(1,128)}', space=vmem, size = 0x12000, scoped, tag = 'internal scratch']
  %s0 = inlined_call_operand.vmem [shape: f32[25,512], index: 0, kind: input, shape index: {}]
  %s1 = inlined_call_operand.vmem [shape: f32[25,512], index: 1, kind: input, shape index: {}]
  %s2 = inlined_call_operand.vmem [shape: f32[25,512], index: 2, kind: input, shape index: {}]
  %s3 = inlined_call_operand.vmem [shape: f32[25,512], index: 3, kind: input, shape index: {}]
  %s4 = inlined_call_operand.vmem [shape: f32[8,25], index: 4, kind: input, shape index: {}]
  %s5 = inlined_call_operand.vmem [shape: f32[8,1], index: 5, kind: input, shape index: {}]
  %s6 = inlined_call_operand.vmem [shape: f32[8,512], index: 6, kind: output, shape index: {}]
  %s7 = sld [smem:[#allocation0]]
  $region34: #{convnet_forward.3} parent=0
    _
  %s9 = ssub.s32 1, %s7
  %s10 = scalar_select 0, %s9, %s7
  // Predicated region
  $region2: #{convnet_forward.3} parent=0 // pred_check
    _
  $region3: #{convnet_forward.3} parent=0 // pred_check_branch
    %12 = sbr.rel (0) target = $region5
  $region4: #{convnet_forward.3} parent=0 // pred_region
    _
  $region5: #{convnet_forward.3} parent=0 // pred_fallthru
    _
  // Predicated region
  $region6: #{convnet_forward.3} parent=0 // pred_check
    _
  $region7: #{convnet_forward.3} parent=0 // pred_check_branch
    %14 = sbr.rel (0) target = $region9
  $region8: #{convnet_forward.3} parent=0 // pred_region
    _
  $region9: #{convnet_forward.3} parent=0 // pred_fallthru
    _
  // Predicated region
  $region10: #{convnet_forward.3} parent=0 // pred_check
    _
  $region11: #{convnet_forward.3} parent=0 // pred_check_branch
    %16 = sbr.rel (0) target = $region13
  $region12: #{convnet_forward.3} parent=0 // pred_region
    _
  $region13: #{convnet_forward.3} parent=0 // pred_fallthru
    _
  // Predicated region
  $region14: #{convnet_forward.3} parent=0 // pred_check
    _
  $region15: #{convnet_forward.3} parent=0 // pred_check_branch
    %18 = sbr.rel (0) target = $region17
  $region16: #{convnet_forward.3} parent=0 // pred_region
    _
  $region17: #{convnet_forward.3} parent=0 // pred_fallthru
    _
  // Predicated region
  $region18: #{convnet_forward.3} parent=0 // pred_check
    _
  $region19: #{convnet_forward.3} parent=0 // pred_check_branch
    %20 = sbr.rel (0) target = $region21
  $region20: #{convnet_forward.3} parent=0 // pred_region
    _
  $region21: #{convnet_forward.3} parent=0 // pred_fallthru
    _
  // Predicated region
  $region22: #{convnet_forward.3} parent=0 // pred_check
    _
  $region23: #{convnet_forward.3} parent=0 // pred_check_branch
    %22 = sbr.rel (0) target = $region25
  $region24: #{convnet_forward.3} parent=0 // pred_region
    _
  $region25: #{convnet_forward.3} parent=0 // pred_fallthru
    _
  %v23 = vld [vmem:[%s4] sm:$0xff]
  %v24 = vld [vmem:[%s5] sm:$0xff]
  %v25 = vld [vmem:[%s0] sm:$0xff]
  %v26 = vld [vmem:[%s0 + $0x8] sm:$0xff]
  %v27 = vld [vmem:[%s0 + $0x10] sm:$0xff]
  %v28 = vld [vmem:[%s0 + $0x18] sm:$0xff]
  %v29 = vld [vmem:[%s0 + $0x20] sm:$0xff]
  %v30 = vld [vmem:[%s0 + $0x28] sm:$0xff]
  %v31 = vld [vmem:[%s0 + $0x30] sm:$0xff]
  %v32 = vld [vmem:[%s0 + $0x38] sm:$0xff]
  %v33 = vld [vmem:[%s0 + $0x40] sm:$0xff]
  %v34 = vld [vmem:[%s0 + $0x48] sm:$0xff]
  %v35 = vld [vmem:[%s0 + $0x50] sm:$0xff]
  %v36 = vld [vmem:[%s0 + $0x58] sm:$0xff]
  %v37 = vld [vmem:[%s0 + $0x60] sm:$0x1]
  %v38 = vld [vmem:[%s0 + $0x68] sm:$0x1]
  %v39 = vld [vmem:[%s0 + $0x70] sm:$0x1]
  %v40 = vld [vmem:[%s0 + $0x78] sm:$0x1]
  %42 = vset.pattern.permute.xlu0 0
  %43 = vperm.xlu0 %42, %v24
  %v44 = vpop.permute.xlu0 %43
  %vm46 = vcmask 203776
  %v48 = vsel %vm46, %v23, 0
  %vm50 = vcmask 1040384
  %v52 = vsel %vm50, %v37, 0
  %v55 = vsel %vm50, %v38, 0
  %v58 = vsel %vm50, %v39, 0
  %v61 = vsel %vm50, %v40, 0
  %63 = vmatprep.subr.mxu0 %v26
  %64 = vmatpush1.msra.mxu0 %v25
  %65 = vmatprep.subr.mxu0 %v30
  %66 = vmatpush1.msra.mxu0 %v29
  %67 = vmatprep.subr.mxu0 %v34
  %68 = vmatpush1.msra.mxu0 %v33
  %69 = vmatprep.subr.mxu0 %v55
  %70 = vmatpush1.msra.mxu0 %v52
  %71 = vmatprep.subr.mxu0 0.0
  %72 = vmatpush1.msra.mxu0 0.0
  %73 = vmatprep.subr.mxu0 0.0
  %74 = vmatpush1.msra.mxu0 0.0
  %75 = vmatprep.subr.mxu0 0.0
  %76 = vmatpush1.msra.mxu0 0.0
  %77 = vmatprep.subr.mxu0 0.0
  %78 = vmatpush1.msra.mxu0 0.0
  %79 = vmatprep.subr.mxu0 0.0
  %80 = vmatpush1.msra.mxu0 0.0
  %81 = vmatprep.subr.mxu0 0.0
  %82 = vmatpush1.msra.mxu0 0.0
  %83 = vmatprep.subr.mxu0 0.0
  %84 = vmatpush1.msra.mxu0 0.0
  %85 = vmatprep.subr.mxu0 0.0
  %86 = vmatpush1.msra.mxu0 0.0
  %87 = vmatprep.subr.mxu0 0.0
  %88 = vmatpush1.msra.mxu0 0.0
  %89 = vmatprep.subr.mxu0 0.0
  %90 = vmatpush1.msra.mxu0 0.0
  %91 = vmatprep.subr.mxu0 0.0
  %92 = vmatpush1.msra.mxu0 0.0
  %93 = vmatprep.subr.mxu0 0.0
  %94 = vmatpush1.msra.mxu0 0.0
  %95 = vmatprep.subr.mxu0 0.0
  %96 = vmatpush1.msra.mxu0 0.0
  %97 = vmatprep.subr.mxu0 0.0
  %98 = vmatpush1.msra.mxu0 0.0
  %99 = vmatprep.subr.mxu0 0.0
  %100 = vmatpush1.msra.mxu0 0.0
  %101 = vmatprep.subr.mxu0 0.0
  %102 = vmatpush1.msra.mxu0 0.0
  %103 = vmatprep.subr.mxu0 0.0
  %104 = vmatpush1.msra.mxu0 0.0
  %105 = vmatprep.subr.mxu0 0.0
  %106 = vmatpush1.msra.mxu0 0.0
  %107 = vmatprep.subr.mxu0 0.0
  %108 = vmatpush1.msra.mxu0 0.0
  %109 = vmatprep.subr.mxu0 0.0
  %110 = vmatpush1.msra.mxu0 0.0
  %111 = vmatprep.subr.mxu0 0.0
  %112 = vmatpush1.msra.mxu0 0.0
  %113 = vmatprep.subr.mxu0 0.0
  %114 = vmatpush1.msra.mxu0 0.0
  %115 = vmatprep.subr.mxu0 0.0
  %116 = vmatpush1.msra.mxu0 0.0
  %117 = vmatprep.subr.mxu0 0.0
  %118 = vmatpush1.msra.mxu0 0.0
  %119 = vmatprep.subr.mxu0 0.0
  %120 = vmatpush1.msra.mxu0 0.0
  %121 = vmatprep.subr.mxu0 0.0
  %122 = vmatpush1.msra.mxu0 0.0
  %123 = vmatprep.subr.mxu0 0.0
  %124 = vmatpush1.msra.mxu0 0.0
  %125 = vmatprep.subr.mxu0 0.0
  %126 = vmatpush1.msra.mxu0 0.0
  %127 = vmatprep.mubr.f32.mxu0 0.0
  %128 = vmatmul.mubr.f32.gmra.mrb[0].mxu0 %v48
  %v129 = vpop.f32.mrb[0].mxu0
  %v130 = vadd.f32 %v44, %v129
  %v131 = vpop.f32.mrb[0].mxu0
  %v132 = vadd.f32 %v44, %v131
  %133 = vdwg.mxu0
  %134 = vmatprep.subr.mxu0 %v28
  %135 = vmatpush1.msra.mxu0 %v27
  %136 = vmatprep.subr.mxu0 %v32
  %137 = vmatpush1.msra.mxu0 %v31
  %138 = vmatprep.subr.mxu0 %v36
  %139 = vmatpush1.msra.mxu0 %v35
  %140 = vmatprep.subr.mxu0 %v61
  %141 = vmatpush1.msra.mxu0 %v58
  %142 = vmatprep.subr.mxu0 0.0
  %143 = vmatpush1.msra.mxu0 0.0
  %144 = vmatprep.subr.mxu0 0.0
  %145 = vmatpush1.msra.mxu0 0.0
  %146 = vmatprep.subr.mxu0 0.0
  %147 = vmatpush1.msra.mxu0 0.0
  %148 = vmatprep.subr.mxu0 0.0
  %149 = vmatpush1.msra.mxu0 0.0
  %150 = vmatprep.subr.mxu0 0.0
  %151 = vmatpush1.msra.mxu0 0.0
  %152 = vmatprep.subr.mxu0 0.0
  %153 = vmatpush1.msra.mxu0 0.0
  %154 = vmatprep.subr.mxu0 0.0
  %155 = vmatpush1.msra.mxu0 0.0
  %156 = vmatprep.subr.mxu0 0.0
  %157 = vmatpush1.msra.mxu0 0.0
  %158 = vmatprep.subr.mxu0 0.0
  %159 = vmatpush1.msra.mxu0 0.0
  %160 = vmatprep.subr.mxu0 0.0
  %161 = vmatpush1.msra.mxu0 0.0
  %162 = vmatprep.subr.mxu0 0.0
  %163 = vmatpush1.msra.mxu0 0.0
  %164 = vmatprep.subr.mxu0 0.0
  %165 = vmatpush1.msra.mxu0 0.0
  %166 = vmatprep.subr.mxu0 0.0
  %167 = vmatpush1.msra.mxu0 0.0
  %168 = vmatprep.subr.mxu0 0.0
  %169 = vmatpush1.msra.mxu0 0.0
  %170 = vmatprep.subr.mxu0 0.0
  %171 = vmatpush1.msra.mxu0 0.0
  %172 = vmatprep.subr.mxu0 0.0
  %173 = vmatpush1.msra.mxu0 0.0
  %174 = vmatprep.subr.mxu0 0.0
  %175 = vmatpush1.msra.mxu0 0.0
  %176 = vmatprep.subr.mxu0 0.0
  %177 = vmatpush1.msra.mxu0 0.0
  %178 = vmatprep.subr.mxu0 0.0
  %179 = vmatpush1.msra.mxu0 0.0
  %180 = vmatprep.subr.mxu0 0.0
  %181 = vmatpush1.msra.mxu0 0.0
  %182 = vmatprep.subr.mxu0 0.0
  %183 = vmatpush1.msra.mxu0 0.0
  %184 = vmatprep.subr.mxu0 0.0
  %185 = vmatpush1.msra.mxu0 0.0
  %186 = vmatprep.subr.mxu0 0.0
  %187 = vmatpush1.msra.mxu0 0.0
  %188 = vmatprep.subr.mxu0 0.0
  %189 = vmatpush1.msra.mxu0 0.0
  %190 = vmatprep.subr.mxu0 0.0
  %191 = vmatpush1.msra.mxu0 0.0
  %192 = vmatprep.subr.mxu0 0.0
  %193 = vmatpush1.msra.mxu0 0.0
  %194 = vmatprep.subr.mxu0 0.0
  %195 = vmatpush1.msra.mxu0 0.0
  %196 = vmatprep.subr.mxu0 0.0
  %197 = vmatpush1.msra.mxu0 0.0
  %198 = vmatprep.mubr.f32.mxu0 0.0
  %199 = vmatmul.mubr.f32.gmra.mrb[0].mxu0 %v48
  %v200 = vpop.f32.mrb[0].mxu0
  %v201 = vadd.f32 %v44, %v200
  %v202 = vpop.f32.mrb[0].mxu0
  %v203 = vadd.f32 %v44, %v202
  %204 = vdwg.mxu0
  %v205 = vmax.f32 %v130, 0.0
  %v206 = vmax.f32 %v132, 0.0
  %v207 = vmax.f32 %v201, 0.0
  %v208 = vmax.f32 %v203, 0.0
  %v209 = vld [vmem:[%s1] sm:$0xff]
  %v210 = vld [vmem:[%s1 + $0x8] sm:$0xff]
  %v211 = vld [vmem:[%s1 + $0x10] sm:$0xff]
  %v212 = vld [vmem:[%s1 + $0x18] sm:$0xff]
  %v213 = vld [vmem:[%s1 + $0x20] sm:$0xff]
  %v214 = vld [vmem:[%s1 + $0x28] sm:$0xff]
  %v215 = vld [vmem:[%s1 + $0x30] sm:$0xff]
  %v216 = vld [vmem:[%s1 + $0x38] sm:$0xff]
  %v217 = vld [vmem:[%s1 + $0x40] sm:$0xff]
  %v218 = vld [vmem:[%s1 + $0x48] sm:$0xff]
  %v219 = vld [vmem:[%s1 + $0x50] sm:$0xff]
  %v220 = vld [vmem:[%s1 + $0x58] sm:$0xff]
  %v221 = vld [vmem:[%s1 + $0x60] sm:$0x1]
  %v222 = vld [vmem:[%s1 + $0x68] sm:$0x1]
  %v223 = vld [vmem:[%s1 + $0x70] sm:$0x1]
  %v224 = vld [vmem:[%s1 + $0x78] sm:$0x1]
  %v226 = vsel %vm50, %v221, 0
  %v229 = vsel %vm50, %v222, 0
  %v232 = vsel %vm50, %v223, 0
  %v235 = vsel %vm50, %v224, 0
  %237 = vmatprep.subr.mxu0 %v210
  %238 = vmatpush1.msra.mxu0 %v209
  %239 = vmatprep.subr.mxu0 %v214
  %240 = vmatpush1.msra.mxu0 %v213
  %241 = vmatprep.subr.mxu0 %v218
  %242 = vmatpush1.msra.mxu0 %v217
  %243 = vmatprep.subr.mxu0 %v229
  %244 = vmatpush1.msra.mxu0 %v226
  %245 = vmatprep.subr.mxu0 0.0
  %246 = vmatpush1.msra.mxu0 0.0
  %247 = vmatprep.subr.mxu0 0.0
  %248 = vmatpush1.msra.mxu0 0.0
  %249 = vmatprep.subr.mxu0 0.0
  %250 = vmatpush1.msra.mxu0 0.0
  %251 = vmatprep.subr.mxu0 0.0
  %252 = vmatpush1.msra.mxu0 0.0
  %253 = vmatprep.subr.mxu0 0.0
  %254 = vmatpush1.msra.mxu0 0.0
  %255 = vmatprep.subr.mxu0 0.0
  %256 = vmatpush1.msra.mxu0 0.0
  %257 = vmatprep.subr.mxu0 0.0
  %258 = vmatpush1.msra.mxu0 0.0
  %259 = vmatprep.subr.mxu0 0.0
  %260 = vmatpush1.msra.mxu0 0.0
  %261 = vmatprep.subr.mxu0 0.0
  %262 = vmatpush1.msra.mxu0 0.0
  %263 = vmatprep.subr.mxu0 0.0
  %264 = vmatpush1.msra.mxu0 0.0
  %265 = vmatprep.subr.mxu0 0.0
  %266 = vmatpush1.msra.mxu0 0.0
  %267 = vmatprep.subr.mxu0 0.0
  %268 = vmatpush1.msra.mxu0 0.0
  %269 = vmatprep.subr.mxu0 0.0
  %270 = vmatpush1.msra.mxu0 0.0
  %271 = vmatprep.subr.mxu0 0.0
  %272 = vmatpush1.msra.mxu0 0.0
  %273 = vmatprep.subr.mxu0 0.0
  %274 = vmatpush1.msra.mxu0 0.0
  %275 = vmatprep.subr.mxu0 0.0
  %276 = vmatpush1.msra.mxu0 0.0
  %277 = vmatprep.subr.mxu0 0.0
  %278 = vmatpush1.msra.mxu0 0.0
  %279 = vmatprep.subr.mxu0 0.0
  %280 = vmatpush1.msra.mxu0 0.0
  %281 = vmatprep.subr.mxu0 0.0
  %282 = vmatpush1.msra.mxu0 0.0
  %283 = vmatprep.subr.mxu0 0.0
  %284 = vmatpush1.msra.mxu0 0.0
  %285 = vmatprep.subr.mxu0 0.0
  %286 = vmatpush1.msra.mxu0 0.0
  %287 = vmatprep.subr.mxu0 0.0
  %288 = vmatpush1.msra.mxu0 0.0
  %289 = vmatprep.subr.mxu0 0.0
  %290 = vmatpush1.msra.mxu0 0.0
  %291 = vmatprep.subr.mxu0 0.0
  %292 = vmatpush1.msra.mxu0 0.0
  %293 = vmatprep.subr.mxu0 0.0
  %294 = vmatpush1.msra.mxu0 0.0
  %295 = vmatprep.subr.mxu0 0.0
  %296 = vmatpush1.msra.mxu0 0.0
  %297 = vmatprep.subr.mxu0 0.0
  %298 = vmatpush1.msra.mxu0 0.0
  %299 = vmatprep.subr.mxu0 0.0
  %300 = vmatpush1.msra.mxu0 0.0
  %301 = vmatprep.mubr.f32.mxu0 0.0
  %302 = vmatmul.mubr.f32.gmra.mrb[0].mxu0 %v48
  %v303 = vpop.f32.mrb[0].mxu0
  %v304 = vadd.f32 %v44, %v303
  %v305 = vpop.f32.mrb[0].mxu0
  %v306 = vadd.f32 %v44, %v305
  %307 = vdwg.mxu0
  %308 = vmatprep.subr.mxu0 %v212
  %309 = vmatpush1.msra.mxu0 %v211
  %310 = vmatprep.subr.mxu0 %v216
  %311 = vmatpush1.msra.mxu0 %v215
  %312 = vmatprep.subr.mxu0 %v220
  %313 = vmatpush1.msra.mxu0 %v219
  %314 = vmatprep.subr.mxu0 %v235
  %315 = vmatpush1.msra.mxu0 %v232
  %316 = vmatprep.subr.mxu0 0.0
  %317 = vmatpush1.msra.mxu0 0.0
  %318 = vmatprep.subr.mxu0 0.0
  %319 = vmatpush1.msra.mxu0 0.0
  %320 = vmatprep.subr.mxu0 0.0
  %321 = vmatpush1.msra.mxu0 0.0
  %322 = vmatprep.subr.mxu0 0.0
  %323 = vmatpush1.msra.mxu0 0.0
  %324 = vmatprep.subr.mxu0 0.0
  %325 = vmatpush1.msra.mxu0 0.0
  %326 = vmatprep.subr.mxu0 0.0
  %327 = vmatpush1.msra.mxu0 0.0
  %328 = vmatprep.subr.mxu0 0.0
  %329 = vmatpush1.msra.mxu0 0.0
  %330 = vmatprep.subr.mxu0 0.0
  %331 = vmatpush1.msra.mxu0 0.0
  %332 = vmatprep.subr.mxu0 0.0
  %333 = vmatpush1.msra.mxu0 0.0
  %334 = vmatprep.subr.mxu0 0.0
  %335 = vmatpush1.msra.mxu0 0.0
  %336 = vmatprep.subr.mxu0 0.0
  %337 = vmatpush1.msra.mxu0 0.0
  %338 = vmatprep.subr.mxu0 0.0
  %339 = vmatpush1.msra.mxu0 0.0
  %340 = vmatprep.subr.mxu0 0.0
  %341 = vmatpush1.msra.mxu0 0.0
  %342 = vmatprep.subr.mxu0 0.0
  %343 = vmatpush1.msra.mxu0 0.0
  %344 = vmatprep.subr.mxu0 0.0
  %345 = vmatpush1.msra.mxu0 0.0
  %346 = vmatprep.subr.mxu0 0.0
  %347 = vmatpush1.msra.mxu0 0.0
  %348 = vmatprep.subr.mxu0 0.0
  %349 = vmatpush1.msra.mxu0 0.0
  %350 = vmatprep.subr.mxu0 0.0
  %351 = vmatpush1.msra.mxu0 0.0
  %352 = vmatprep.subr.mxu0 0.0
  %353 = vmatpush1.msra.mxu0 0.0
  %354 = vmatprep.subr.mxu0 0.0
  %355 = vmatpush1.msra.mxu0 0.0
  %356 = vmatprep.subr.mxu0 0.0
  %357 = vmatpush1.msra.mxu0 0.0
  %358 = vmatprep.subr.mxu0 0.0
  %359 = vmatpush1.msra.mxu0 0.0
  %360 = vmatprep.subr.mxu0 0.0
  %361 = vmatpush1.msra.mxu0 0.0
  %362 = vmatprep.subr.mxu0 0.0
  %363 = vmatpush1.msra.mxu0 0.0
  %364 = vmatprep.subr.mxu0 0.0
  %365 = vmatpush1.msra.mxu0 0.0
  %366 = vmatprep.subr.mxu0 0.0
  %367 = vmatpush1.msra.mxu0 0.0
  %368 = vmatprep.subr.mxu0 0.0
  %369 = vmatpush1.msra.mxu0 0.0
  %370 = vmatprep.subr.mxu0 0.0
  %371 = vmatpush1.msra.mxu0 0.0
  %372 = vmatprep.mubr.f32.mxu0 0.0
  %373 = vmatmul.mubr.f32.gmra.mrb[0].mxu0 %v48
  %v374 = vpop.f32.mrb[0].mxu0
  %v375 = vadd.f32 %v44, %v374
  %v376 = vpop.f32.mrb[0].mxu0
  %v377 = vadd.f32 %v44, %v376
  %378 = vdwg.mxu0
  %v379 = vmax.f32 %v304, 0.0
  %v380 = vmax.f32 %v306, 0.0
  %v381 = vmax.f32 %v375, 0.0
  %v382 = vmax.f32 %v377, 0.0
  %v383 = vmax.f32 %v205, %v379
  %v384 = vmax.f32 %v206, %v380
  %v385 = vmax.f32 %v207, %v381
  %v386 = vmax.f32 %v208, %v382
  %v387 = vld [vmem:[%s2] sm:$0xff]
  %v388 = vld [vmem:[%s2 + $0x8] sm:$0xff]
  %v389 = vld [vmem:[%s2 + $0x10] sm:$0xff]
  %v390 = vld [vmem:[%s2 + $0x18] sm:$0xff]
  %v391 = vld [vmem:[%s2 + $0x20] sm:$0xff]
  %v392 = vld [vmem:[%s2 + $0x28] sm:$0xff]
  %v393 = vld [vmem:[%s2 + $0x30] sm:$0xff]
  %v394 = vld [vmem:[%s2 + $0x38] sm:$0xff]
  %v395 = vld [vmem:[%s2 + $0x40] sm:$0xff]
  %v396 = vld [vmem:[%s2 + $0x48] sm:$0xff]
  %v397 = vld [vmem:[%s2 + $0x50] sm:$0xff]
  %v398 = vld [vmem:[%s2 + $0x58] sm:$0xff]
  %v399 = vld [vmem:[%s2 + $0x60] sm:$0x1]
  %v400 = vld [vmem:[%s2 + $0x68] sm:$0x1]
  %v401 = vld [vmem:[%s2 + $0x70] sm:$0x1]
  %v402 = vld [vmem:[%s2 + $0x78] sm:$0x1]
  %v404 = vsel %vm50, %v399, 0
  %v407 = vsel %vm50, %v400, 0
  %v410 = vsel %vm50, %v401, 0
  %v413 = vsel %vm50, %v402, 0
  %415 = vmatprep.subr.mxu0 %v388
  %416 = vmatpush1.msra.mxu0 %v387
  %417 = vmatprep.subr.mxu0 %v392
  %418 = vmatpush1.msra.mxu0 %v391
  %419 = vmatprep.subr.mxu0 %v396
  %420 = vmatpush1.msra.mxu0 %v395
  %421 = vmatprep.subr.mxu0 %v407
  %422 = vmatpush1.msra.mxu0 %v404
  %423 = vmatprep.subr.mxu0 0.0
  %424 = vmatpush1.msra.mxu0 0.0
  %425 = vmatprep.subr.mxu0 0.0
  %426 = vmatpush1.msra.mxu0 0.0
  %427 = vmatprep.subr.mxu0 0.0
  %428 = vmatpush1.msra.mxu0 0.0
  %429 = vmatprep.subr.mxu0 0.0
  %430 = vmatpush1.msra.mxu0 0.0
  %431 = vmatprep.subr.mxu0 0.0
  %432 = vmatpush1.msra.mxu0 0.0
  %433 = vmatprep.subr.mxu0 0.0
  %434 = vmatpush1.msra.mxu0 0.0
  %435 = vmatprep.subr.mxu0 0.0
  %436 = vmatpush1.msra.mxu0 0.0
  %437 = vmatprep.subr.mxu0 0.0
  %438 = vmatpush1.msra.mxu0 0.0
  %439 = vmatprep.subr.mxu0 0.0
  %440 = vmatpush1.msra.mxu0 0.0
  %441 = vmatprep.subr.mxu0 0.0
  %442 = vmatpush1.msra.mxu0 0.0
  %443 = vmatprep.subr.mxu0 0.0
  %444 = vmatpush1.msra.mxu0 0.0
  %445 = vmatprep.subr.mxu0 0.0
  %446 = vmatpush1.msra.mxu0 0.0
  %447 = vmatprep.subr.mxu0 0.0
  %448 = vmatpush1.msra.mxu0 0.0
  %449 = vmatprep.subr.mxu0 0.0
  %450 = vmatpush1.msra.mxu0 0.0
  %451 = vmatprep.subr.mxu0 0.0
  %452 = vmatpush1.msra.mxu0 0.0
  %453 = vmatprep.subr.mxu0 0.0
  %454 = vmatpush1.msra.mxu0 0.0
  %455 = vmatprep.subr.mxu0 0.0
  %456 = vmatpush1.msra.mxu0 0.0
  %457 = vmatprep.subr.mxu0 0.0
  %458 = vmatpush1.msra.mxu0 0.0
  %459 = vmatprep.subr.mxu0 0.0
  %460 = vmatpush1.msra.mxu0 0.0
  %461 = vmatprep.subr.mxu0 0.0
  %462 = vmatpush1.msra.mxu0 0.0
  %463 = vmatprep.subr.mxu0 0.0
  %464 = vmatpush1.msra.mxu0 0.0
  %465 = vmatprep.subr.mxu0 0.0
  %466 = vmatpush1.msra.mxu0 0.0
  %467 = vmatprep.subr.mxu0 0.0
  %468 = vmatpush1.msra.mxu0 0.0
  %469 = vmatprep.subr.mxu0 0.0
  %470 = vmatpush1.msra.mxu0 0.0
  %471 = vmatprep.subr.mxu0 0.0
  %472 = vmatpush1.msra.mxu0 0.0
  %473 = vmatprep.subr.mxu0 0.0
  %474 = vmatpush1.msra.mxu0 0.0
  %475 = vmatprep.subr.mxu0 0.0
  %476 = vmatpush1.msra.mxu0 0.0
  %477 = vmatprep.subr.mxu0 0.0
  %478 = vmatpush1.msra.mxu0 0.0
  %479 = vmatprep.mubr.f32.mxu0 0.0
  %480 = vmatmul.mubr.f32.gmra.mrb[0].mxu0 %v48
  %v481 = vpop.f32.mrb[0].mxu0
  %v482 = vadd.f32 %v44, %v481
  %v483 = vpop.f32.mrb[0].mxu0
  %v484 = vadd.f32 %v44, %v483
  %485 = vdwg.mxu0
  %486 = vmatprep.subr.mxu0 %v390
  %487 = vmatpush1.msra.mxu0 %v389
  %488 = vmatprep.subr.mxu0 %v394
  %489 = vmatpush1.msra.mxu0 %v393
  %490 = vmatprep.subr.mxu0 %v398
  %491 = vmatpush1.msra.mxu0 %v397
  %492 = vmatprep.subr.mxu0 %v413
  %493 = vmatpush1.msra.mxu0 %v410
  %494 = vmatprep.subr.mxu0 0.0
  %495 = vmatpush1.msra.mxu0 0.0
  %496 = vmatprep.subr.mxu0 0.0
  %497 = vmatpush1.msra.mxu0 0.0
  %498 = vmatprep.subr.mxu0 0.0
  %499 = vmatpush1.msra.mxu0 0.0
  %500 = vmatprep.subr.mxu0 0.0
  %501 = vmatpush1.msra.mxu0 0.0
  %502 = vmatprep.subr.mxu0 0.0
  %503 = vmatpush1.msra.mxu0 0.0
  %504 = vmatprep.subr.mxu0 0.0
  %505 = vmatpush1.msra.mxu0 0.0
  %506 = vmatprep.subr.mxu0 0.0
  %507 = vmatpush1.msra.mxu0 0.0
  %508 = vmatprep.subr.mxu0 0.0
  %509 = vmatpush1.msra.mxu0 0.0
  %510 = vmatprep.subr.mxu0 0.0
  %511 = vmatpush1.msra.mxu0 0.0
  %512 = vmatprep.subr.mxu0 0.0
  %513 = vmatpush1.msra.mxu0 0.0
  %514 = vmatprep.subr.mxu0 0.0
  %515 = vmatpush1.msra.mxu0 0.0
  %516 = vmatprep.subr.mxu0 0.0
  %517 = vmatpush1.msra.mxu0 0.0
  %518 = vmatprep.subr.mxu0 0.0
  %519 = vmatpush1.msra.mxu0 0.0
  %520 = vmatprep.subr.mxu0 0.0
  %521 = vmatpush1.msra.mxu0 0.0
  %522 = vmatprep.subr.mxu0 0.0
  %523 = vmatpush1.msra.mxu0 0.0
  %524 = vmatprep.subr.mxu0 0.0
  %525 = vmatpush1.msra.mxu0 0.0
  %526 = vmatprep.subr.mxu0 0.0
  %527 = vmatpush1.msra.mxu0 0.0
  %528 = vmatprep.subr.mxu0 0.0
  %529 = vmatpush1.msra.mxu0 0.0
  %530 = vmatprep.subr.mxu0 0.0
  %531 = vmatpush1.msra.mxu0 0.0
  %532 = vmatprep.subr.mxu0 0.0
  %533 = vmatpush1.msra.mxu0 0.0
  %534 = vmatprep.subr.mxu0 0.0
  %535 = vmatpush1.msra.mxu0 0.0
  %536 = vmatprep.subr.mxu0 0.0
  %537 = vmatpush1.msra.mxu0 0.0
  %538 = vmatprep.subr.mxu0 0.0
  %539 = vmatpush1.msra.mxu0 0.0
  %540 = vmatprep.subr.mxu0 0.0
  %541 = vmatpush1.msra.mxu0 0.0
  %542 = vmatprep.subr.mxu0 0.0
  %543 = vmatpush1.msra.mxu0 0.0
  %544 = vmatprep.subr.mxu0 0.0
  %545 = vmatpush1.msra.mxu0 0.0
  %546 = vmatprep.subr.mxu0 0.0
  %547 = vmatpush1.msra.mxu0 0.0
  %548 = vmatprep.subr.mxu0 0.0
  %549 = vmatpush1.msra.mxu0 0.0
  %550 = vmatprep.mubr.f32.mxu0 0.0
  %551 = vmatmul.mubr.f32.gmra.mrb[0].mxu0 %v48
  %v552 = vpop.f32.mrb[0].mxu0
  %v553 = vadd.f32 %v44, %v552
  %v554 = vpop.f32.mrb[0].mxu0
  %v555 = vadd.f32 %v44, %v554
  %556 = vdwg.mxu0
  %v557 = vmax.f32 %v482, 0.0
  %v558 = vmax.f32 %v484, 0.0
  %v559 = vmax.f32 %v553, 0.0
  %v560 = vmax.f32 %v555, 0.0
  %v561 = vld [vmem:[%s3] sm:$0xff]
  %v562 = vld [vmem:[%s3 + $0x8] sm:$0xff]
  %v563 = vld [vmem:[%s3 + $0x10] sm:$0xff]
  %v564 = vld [vmem:[%s3 + $0x18] sm:$0xff]
  %v565 = vld [vmem:[%s3 + $0x20] sm:$0xff]
  %v566 = vld [vmem:[%s3 + $0x28] sm:$0xff]
  %v567 = vld [vmem:[%s3 + $0x30] sm:$0xff]
  %v568 = vld [vmem:[%s3 + $0x38] sm:$0xff]
  %v569 = vld [vmem:[%s3 + $0x40] sm:$0xff]
  %v570 = vld [vmem:[%s3 + $0x48] sm:$0xff]
  %v571 = vld [vmem:[%s3 + $0x50] sm:$0xff]
  %v572 = vld [vmem:[%s3 + $0x58] sm:$0xff]
  %v573 = vld [vmem:[%s3 + $0x60] sm:$0x1]
  %v574 = vld [vmem:[%s3 + $0x68] sm:$0x1]
  %v575 = vld [vmem:[%s3 + $0x70] sm:$0x1]
  %v576 = vld [vmem:[%s3 + $0x78] sm:$0x1]
  %v578 = vsel %vm50, %v573, 0
  %v581 = vsel %vm50, %v574, 0
  %v584 = vsel %vm50, %v575, 0
  %v587 = vsel %vm50, %v576, 0
  %589 = vmatprep.subr.mxu0 %v562
  %590 = vmatpush1.msra.mxu0 %v561
  %591 = vmatprep.subr.mxu0 %v566
  %592 = vmatpush1.msra.mxu0 %v565
  %593 = vmatprep.subr.mxu0 %v570
  %594 = vmatpush1.msra.mxu0 %v569
  %595 = vmatprep.subr.mxu0 %v581
  %596 = vmatpush1.msra.mxu0 %v578
  %597 = vmatprep.subr.mxu0 0.0
  %598 = vmatpush1.msra.mxu0 0.0
  %599 = vmatprep.subr.mxu0 0.0
  %600 = vmatpush1.msra.mxu0 0.0
  %601 = vmatprep.subr.mxu0 0.0
  %602 = vmatpush1.msra.mxu0 0.0
  %603 = vmatprep.subr.mxu0 0.0
  %604 = vmatpush1.msra.mxu0 0.0
  %605 = vmatprep.subr.mxu0 0.0
  %606 = vmatpush1.msra.mxu0 0.0
  %607 = vmatprep.subr.mxu0 0.0
  %608 = vmatpush1.msra.mxu0 0.0
  %609 = vmatprep.subr.mxu0 0.0
  %610 = vmatpush1.msra.mxu0 0.0
  %611 = vmatprep.subr.mxu0 0.0
  %612 = vmatpush1.msra.mxu0 0.0
  %613 = vmatprep.subr.mxu0 0.0
  %614 = vmatpush1.msra.mxu0 0.0
  %615 = vmatprep.subr.mxu0 0.0
  %616 = vmatpush1.msra.mxu0 0.0
  %617 = vmatprep.subr.mxu0 0.0
  %618 = vmatpush1.msra.mxu0 0.0
  %619 = vmatprep.subr.mxu0 0.0
  %620 = vmatpush1.msra.mxu0 0.0
  %621 = vmatprep.subr.mxu0 0.0
  %622 = vmatpush1.msra.mxu0 0.0
  %623 = vmatprep.subr.mxu0 0.0
  %624 = vmatpush1.msra.mxu0 0.0
  %625 = vmatprep.subr.mxu0 0.0
  %626 = vmatpush1.msra.mxu0 0.0
  %627 = vmatprep.subr.mxu0 0.0
  %628 = vmatpush1.msra.mxu0 0.0
  %629 = vmatprep.subr.mxu0 0.0
  %630 = vmatpush1.msra.mxu0 0.0
  %631 = vmatprep.subr.mxu0 0.0
  %632 = vmatpush1.msra.mxu0 0.0
  %633 = vmatprep.subr.mxu0 0.0
  %634 = vmatpush1.msra.mxu0 0.0
  %635 = vmatprep.subr.mxu0 0.0
  %636 = vmatpush1.msra.mxu0 0.0
  %637 = vmatprep.subr.mxu0 0.0
  %638 = vmatpush1.msra.mxu0 0.0
  %639 = vmatprep.subr.mxu0 0.0
  %640 = vmatpush1.msra.mxu0 0.0
  %641 = vmatprep.subr.mxu0 0.0
  %642 = vmatpush1.msra.mxu0 0.0
  %643 = vmatprep.subr.mxu0 0.0
  %644 = vmatpush1.msra.mxu0 0.0
  %645 = vmatprep.subr.mxu0 0.0
  %646 = vmatpush1.msra.mxu0 0.0
  %647 = vmatprep.subr.mxu0 0.0
  %648 = vmatpush1.msra.mxu0 0.0
  %649 = vmatprep.subr.mxu0 0.0
  %650 = vmatpush1.msra.mxu0 0.0
  %651 = vmatprep.subr.mxu0 0.0
  %652 = vmatpush1.msra.mxu0 0.0
  %653 = vmatprep.mubr.f32.mxu0 0.0
  %654 = vmatmul.mubr.f32.gmra.mrb[0].mxu0 %v48
  %v655 = vpop.f32.mrb[0].mxu0
  %v656 = vadd.f32 %v44, %v655
  %v657 = vpop.f32.mrb[0].mxu0
  %v658 = vadd.f32 %v44, %v657
  %659 = vdwg.mxu0
  %660 = vmatprep.subr.mxu0 %v564
  %661 = vmatpush1.msra.mxu0 %v563
  %662 = vmatprep.subr.mxu0 %v568
  %663 = vmatpush1.msra.mxu0 %v567
  %664 = vmatprep.subr.mxu0 %v572
  %665 = vmatpush1.msra.mxu0 %v571
  %666 = vmatprep.subr.mxu0 %v587
  %667 = vmatpush1.msra.mxu0 %v584
  %668 = vmatprep.subr.mxu0 0.0
  %669 = vmatpush1.msra.mxu0 0.0
  %670 = vmatprep.subr.mxu0 0.0
  %671 = vmatpush1.msra.mxu0 0.0
  %672 = vmatprep.subr.mxu0 0.0
  %673 = vmatpush1.msra.mxu0 0.0
  %674 = vmatprep.subr.mxu0 0.0
  %675 = vmatpush1.msra.mxu0 0.0
  %676 = vmatprep.subr.mxu0 0.0
  %677 = vmatpush1.msra.mxu0 0.0
  %678 = vmatprep.subr.mxu0 0.0
  %679 = vmatpush1.msra.mxu0 0.0
  %680 = vmatprep.subr.mxu0 0.0
  %681 = vmatpush1.msra.mxu0 0.0
  %682 = vmatprep.subr.mxu0 0.0
  %683 = vmatpush1.msra.mxu0 0.0
  %684 = vmatprep.subr.mxu0 0.0
  %685 = vmatpush1.msra.mxu0 0.0
  %686 = vmatprep.subr.mxu0 0.0
  %687 = vmatpush1.msra.mxu0 0.0
  %688 = vmatprep.subr.mxu0 0.0
  %689 = vmatpush1.msra.mxu0 0.0
  %690 = vmatprep.subr.mxu0 0.0
  %691 = vmatpush1.msra.mxu0 0.0
  %692 = vmatprep.subr.mxu0 0.0
  %693 = vmatpush1.msra.mxu0 0.0
  %694 = vmatprep.subr.mxu0 0.0
  %695 = vmatpush1.msra.mxu0 0.0
  %696 = vmatprep.subr.mxu0 0.0
  %697 = vmatpush1.msra.mxu0 0.0
  %698 = vmatprep.subr.mxu0 0.0
  %699 = vmatpush1.msra.mxu0 0.0
  %700 = vmatprep.subr.mxu0 0.0
  %701 = vmatpush1.msra.mxu0 0.0
  %702 = vmatprep.subr.mxu0 0.0
  %703 = vmatpush1.msra.mxu0 0.0
  %704 = vmatprep.subr.mxu0 0.0
  %705 = vmatpush1.msra.mxu0 0.0
  %706 = vmatprep.subr.mxu0 0.0
  %707 = vmatpush1.msra.mxu0 0.0
  %708 = vmatprep.subr.mxu0 0.0
  %709 = vmatpush1.msra.mxu0 0.0
  %710 = vmatprep.subr.mxu0 0.0
  %711 = vmatpush1.msra.mxu0 0.0
  %712 = vmatprep.subr.mxu0 0.0
  %713 = vmatpush1.msra.mxu0 0.0
  %714 = vmatprep.subr.mxu0 0.0
  %715 = vmatpush1.msra.mxu0 0.0
  %716 = vmatprep.subr.mxu0 0.0
  %717 = vmatpush1.msra.mxu0 0.0
  %718 = vmatprep.subr.mxu0 0.0
  %719 = vmatpush1.msra.mxu0 0.0
  %720 = vmatprep.subr.mxu0 0.0
  %721 = vmatpush1.msra.mxu0 0.0
  %722 = vmatprep.subr.mxu0 0.0
  %723 = vmatpush1.msra.mxu0 0.0
  %724 = vmatprep.mubr.f32.mxu0 0.0
  %725 = vmatmul.mubr.f32.gmra.mrb[0].mxu0 %v48
  %v726 = vpop.f32.mrb[0].mxu0
  %v727 = vadd.f32 %v44, %v726
  %v728 = vpop.f32.mrb[0].mxu0
  %v729 = vadd.f32 %v44, %v728
  %730 = vdwg.mxu0
  %v731 = vmax.f32 %v656, 0.0
  %v732 = vmax.f32 %v658, 0.0
  %v733 = vmax.f32 %v727, 0.0
  %v734 = vmax.f32 %v729, 0.0
  %v735 = vmax.f32 %v557, %v731
  %v736 = vmax.f32 %v558, %v732
  %v737 = vmax.f32 %v559, %v733
  %v738 = vmax.f32 %v560, %v734
  %v739 = vmax.f32 %v383, %v735
  %v740 = vmax.f32 %v384, %v736
  %v741 = vmax.f32 %v385, %v737
  %v742 = vmax.f32 %v386, %v738
  %743 = vst [vmem:[%s6] sm:$0xff] %v739
  %744 = vst [vmem:[%s6 + $0x8] sm:$0xff] %v740
  %745 = vst [vmem:[%s6 + $0x10] sm:$0xff] %v741
  %746 = vst [vmem:[%s6 + $0x18] sm:$0xff] %v742
  // Predicated region
  $region26: #{convnet_forward.3} parent=0 // pred_check
    _
  $region27: #{convnet_forward.3} parent=0 // pred_check_branch
    %748 = sbr.rel (0) target = $region29
  $region28: #{convnet_forward.3} parent=0 // pred_region
    _
  $region29: #{convnet_forward.3} parent=0 // pred_fallthru
    _
  // Predicated region
  $region30: #{convnet_forward.3} parent=0 // pred_check
    _
  $region31: #{convnet_forward.3} parent=0 // pred_check_branch
    %750 = sbr.rel (0) target = $region33
  $region32: #{convnet_forward.3} parent=0 // pred_region
    _
  $region33: #{convnet_forward.3} parent=0 // pred_fallthru
    _

// kernel: convnet_forward.4
$region0: #{convnet_forward.4}
  #allocation0 [shape = 'u32[]', space=smem, size = 0x4, offset = 0x4, fixed_abs, tag = 'smem constant byte address 0x4 - core index']
  #allocation1 [shape = 'u32[144,128]{1,0:T(1,128)}', space=vmem, size = 0x12000, scoped, tag = 'internal scratch']
  %s0 = inlined_call_operand.vmem [shape: f32[72,128], index: 0, kind: input, shape index: {}]
  %s1 = inlined_call_operand.vmem [shape: f32[72,128], index: 1, kind: input, shape index: {}]
  %s2 = inlined_call_operand.vmem [shape: f32[72,128], index: 2, kind: input, shape index: {}]
  %s3 = inlined_call_operand.vmem [shape: f32[72,128], index: 3, kind: input, shape index: {}]
  %s4 = inlined_call_operand.vmem [shape: f32[16,72], index: 4, kind: input, shape index: {}]
  %s5 = inlined_call_operand.vmem [shape: f32[16,1], index: 5, kind: input, shape index: {}]
  %s6 = inlined_call_operand.vmem [shape: f32[16,128], index: 6, kind: output, shape index: {}]
  %s7 = sld [smem:[#allocation0]]
  $region34: #{convnet_forward.4} parent=0
    _
  %s9 = ssub.s32 1, %s7
  %s10 = scalar_select 0, %s9, %s7
  // Predicated region
  $region2: #{convnet_forward.4} parent=0 // pred_check
    _
  $region3: #{convnet_forward.4} parent=0 // pred_check_branch
    %12 = sbr.rel (0) target = $region5
  $region4: #{convnet_forward.4} parent=0 // pred_region
    _
  $region5: #{convnet_forward.4} parent=0 // pred_fallthru
    _
  // Predicated region
  $region6: #{convnet_forward.4} parent=0 // pred_check
    _
  $region7: #{convnet_forward.4} parent=0 // pred_check_branch
    %14 = sbr.rel (0) target = $region9
  $region8: #{convnet_forward.4} parent=0 // pred_region
    _
  $region9: #{convnet_forward.4} parent=0 // pred_fallthru
    _
  // Predicated region
  $region10: #{convnet_forward.4} parent=0 // pred_check
    _
  $region11: #{convnet_forward.4} parent=0 // pred_check_branch
    %16 = sbr.rel (0) target = $region13
  $region12: #{convnet_forward.4} parent=0 // pred_region
    _
  $region13: #{convnet_forward.4} parent=0 // pred_fallthru
    _
  // Predicated region
  $region14: #{convnet_forward.4} parent=0 // pred_check
    _
  $region15: #{convnet_forward.4} parent=0 // pred_check_branch
    %18 = sbr.rel (0) target = $region17
  $region16: #{convnet_forward.4} parent=0 // pred_region
    _
  $region17: #{convnet_forward.4} parent=0 // pred_fallthru
    _
  // Predicated region
  $region18: #{convnet_forward.4} parent=0 // pred_check
    _
  $region19: #{convnet_forward.4} parent=0 // pred_check_branch
    %20 = sbr.rel (0) target = $region21
  $region20: #{convnet_forward.4} parent=0 // pred_region
    _
  $region21: #{convnet_forward.4} parent=0 // pred_fallthru
    _
  // Predicated region
  $region22: #{convnet_forward.4} parent=0 // pred_check
    _
  $region23: #{convnet_forward.4} parent=0 // pred_check_branch
    %22 = sbr.rel (0) target = $region25
  $region24: #{convnet_forward.4} parent=0 // pred_region
    _
  $region25: #{convnet_forward.4} parent=0 // pred_fallthru
    _
  %v23 = vld [vmem:[%s4] sm:$0xff]
  %v24 = vld [vmem:[%s4 + $0x8] sm:$0xff]
  %v25 = vld [vmem:[%s5] sm:$0xff]
  %v26 = vld [vmem:[%s5 + $0x8] sm:$0xff]
  %v27 = vld [vmem:[%s0] sm:$0xff]
  %v28 = vld [vmem:[%s0 + $0x8] sm:$0xff]
  %v29 = vld [vmem:[%s0 + $0x10] sm:$0xff]
  %v30 = vld [vmem:[%s0 + $0x18] sm:$0xff]
  %v31 = vld [vmem:[%s0 + $0x20] sm:$0xff]
  %v32 = vld [vmem:[%s0 + $0x28] sm:$0xff]
  %v33 = vld [vmem:[%s0 + $0x30] sm:$0xff]
  %v34 = vld [vmem:[%s0 + $0x38] sm:$0xff]
  %v35 = vld [vmem:[%s0 + $0x40] sm:$0xff]
  %37 = vset.pattern.permute.xlu0 0
  %38 = vperm.xlu0 %37, %v25
  %v39 = vpop.permute.xlu0 %38
  %42 = vset.pattern.permute.xlu0 0
  %43 = vperm.xlu0 %42, %v26
  %v44 = vpop.permute.xlu0 %43
  %vm46 = vcmask 588800
  %v48 = vsel %vm46, %v23, 0
  %v51 = vsel %vm46, %v24, 0
  %53 = vmatprep.subr.mxu0 0.0
  %54 = vmatpush1.msra.mxu0 %v27
  %55 = vmatprep.subr.mxu0 0.0
  %56 = vmatpush1.msra.mxu0 %v28
  %57 = vmatprep.subr.mxu0 0.0
  %58 = vmatpush1.msra.mxu0 %v29
  %59 = vmatprep.subr.mxu0 0.0
  %60 = vmatpush1.msra.mxu0 %v30
  %61 = vmatprep.subr.mxu0 0.0
  %62 = vmatpush1.msra.mxu0 %v31
  %63 = vmatprep.subr.mxu0 0.0
  %64 = vmatpush1.msra.mxu0 %v32
  %65 = vmatprep.subr.mxu0 0.0
  %66 = vmatpush1.msra.mxu0 %v33
  %67 = vmatprep.subr.mxu0 0.0
  %68 = vmatpush1.msra.mxu0 %v34
  %69 = vmatprep.subr.mxu0 0.0
  %70 = vmatpush1.msra.mxu0 %v35
  %71 = vmatprep.subr.mxu0 0.0
  %72 = vmatpush1.msra.mxu0 0.0
  %73 = vmatprep.subr.mxu0 0.0
  %74 = vmatpush1.msra.mxu0 0.0
  %75 = vmatprep.subr.mxu0 0.0
  %76 = vmatpush1.msra.mxu0 0.0
  %77 = vmatprep.subr.mxu0 0.0
  %78 = vmatpush1.msra.mxu0 0.0
  %79 = vmatprep.subr.mxu0 0.0
  %80 = vmatpush1.msra.mxu0 0.0
  %81 = vmatprep.subr.mxu0 0.0
  %82 = vmatpush1.msra.mxu0 0.0
  %83 = vmatprep.subr.mxu0 0.0
  %84 = vmatpush1.msra.mxu0 0.0
  %85 = vmatprep.subr.mxu0 0.0
  %86 = vmatpush1.msra.mxu0 0.0
  %87 = vmatprep.subr.mxu0 0.0
  %88 = vmatpush1.msra.mxu0 0.0
  %89 = vmatprep.subr.mxu0 0.0
  %90 = vmatpush1.msra.mxu0 0.0
  %91 = vmatprep.subr.mxu0 0.0
  %92 = vmatpush1.msra.mxu0 0.0
  %93 = vmatprep.subr.mxu0 0.0
  %94 = vmatpush1.msra.mxu0 0.0
  %95 = vmatprep.subr.mxu0 0.0
  %96 = vmatpush1.msra.mxu0 0.0
  %97 = vmatprep.subr.mxu0 0.0
  %98 = vmatpush1.msra.mxu0 0.0
  %99 = vmatprep.subr.mxu0 0.0
  %100 = vmatpush1.msra.mxu0 0.0
  %101 = vmatprep.subr.mxu0 0.0
  %102 = vmatpush1.msra.mxu0 0.0
  %103 = vmatprep.subr.mxu0 0.0
  %104 = vmatpush1.msra.mxu0 0.0
  %105 = vmatprep.subr.mxu0 0.0
  %106 = vmatpush1.msra.mxu0 0.0
  %107 = vmatprep.subr.mxu0 0.0
  %108 = vmatpush1.msra.mxu0 0.0
  %109 = vmatprep.subr.mxu0 0.0
  %110 = vmatpush1.msra.mxu0 0.0
  %111 = vmatprep.subr.mxu0 0.0
  %112 = vmatpush1.msra.mxu0 0.0
  %113 = vmatprep.subr.mxu0 0.0
  %114 = vmatpush1.msra.mxu0 0.0
  %115 = vmatprep.subr.mxu0 0.0
  %116 = vmatpush1.msra.mxu0 0.0
  %117 = vmatprep.mubr.f32.mxu0 0.0
  %118 = vmatmul.mubr.f32.gmra.mrb[0].mxu0 %v48
  %v119 = vpop.f32.mrb[0].mxu0
  %v120 = vadd.f32 %v39, %v119
  %v121 = vpop.f32.mrb[0].mxu0
  %122 = vmatprep.mubr.f32.mxu0 0.0
  %123 = vmatmul.mubr.f32.gmra.mrb[0].mxu0 %v51
  %v124 = vpop.f32.mrb[0].mxu0
  %v125 = vadd.f32 %v44, %v124
  %v126 = vpop.f32.mrb[0].mxu0
  %127 = vdwg.mxu0
  %v128 = vmax.f32 %v120, 0.0
  %v129 = vmax.f32 %v125, 0.0
  %v130 = vld [vmem:[%s1] sm:$0xff]
  %v131 = vld [vmem:[%s1 + $0x8] sm:$0xff]
  %v132 = vld [vmem:[%s1 + $0x10] sm:$0xff]
  %v133 = vld [vmem:[%s1 + $0x18] sm:$0xff]
  %v134 = vld [vmem:[%s1 + $0x20] sm:$0xff]
  %v135 = vld [vmem:[%s1 + $0x28] sm:$0xff]
  %v136 = vld [vmem:[%s1 + $0x30] sm:$0xff]
  %v137 = vld [vmem:[%s1 + $0x38] sm:$0xff]
  %v138 = vld [vmem:[%s1 + $0x40] sm:$0xff]
  %139 = vmatprep.subr.mxu0 0.0
  %140 = vmatpush1.msra.mxu0 %v130
  %141 = vmatprep.subr.mxu0 0.0
  %142 = vmatpush1.msra.mxu0 %v131
  %143 = vmatprep.subr.mxu0 0.0
  %144 = vmatpush1.msra.mxu0 %v132
  %145 = vmatprep.subr.mxu0 0.0
  %146 = vmatpush1.msra.mxu0 %v133
  %147 = vmatprep.subr.mxu0 0.0
  %148 = vmatpush1.msra.mxu0 %v134
  %149 = vmatprep.subr.mxu0 0.0
  %150 = vmatpush1.msra.mxu0 %v135
  %151 = vmatprep.subr.mxu0 0.0
  %152 = vmatpush1.msra.mxu0 %v136
  %153 = vmatprep.subr.mxu0 0.0
  %154 = vmatpush1.msra.mxu0 %v137
  %155 = vmatprep.subr.mxu0 0.0
  %156 = vmatpush1.msra.mxu0 %v138
  %157 = vmatprep.subr.mxu0 0.0
  %158 = vmatpush1.msra.mxu0 0.0
  %159 = vmatprep.subr.mxu0 0.0
  %160 = vmatpush1.msra.mxu0 0.0
  %161 = vmatprep.subr.mxu0 0.0
  %162 = vmatpush1.msra.mxu0 0.0
  %163 = vmatprep.subr.mxu0 0.0
  %164 = vmatpush1.msra.mxu0 0.0
  %165 = vmatprep.subr.mxu0 0.0
  %166 = vmatpush1.msra.mxu0 0.0
  %167 = vmatprep.subr.mxu0 0.0
  %168 = vmatpush1.msra.mxu0 0.0
  %169 = vmatprep.subr.mxu0 0.0
  %170 = vmatpush1.msra.mxu0 0.0
  %171 = vmatprep.subr.mxu0 0.0
  %172 = vmatpush1.msra.mxu0 0.0
  %173 = vmatprep.subr.mxu0 0.0
  %174 = vmatpush1.msra.mxu0 0.0
  %175 = vmatprep.subr.mxu0 0.0
  %176 = vmatpush1.msra.mxu0 0.0
  %177 = vmatprep.subr.mxu0 0.0
  %178 = vmatpush1.msra.mxu0 0.0
  %179 = vmatprep.subr.mxu0 0.0
  %180 = vmatpush1.msra.mxu0 0.0
  %181 = vmatprep.subr.mxu0 0.0
  %182 = vmatpush1.msra.mxu0 0.0
  %183 = vmatprep.subr.mxu0 0.0
  %184 = vmatpush1.msra.mxu0 0.0
  %185 = vmatprep.subr.mxu0 0.0
  %186 = vmatpush1.msra.mxu0 0.0
  %187 = vmatprep.subr.mxu0 0.0
  %188 = vmatpush1.msra.mxu0 0.0
  %189 = vmatprep.subr.mxu0 0.0
  %190 = vmatpush1.msra.mxu0 0.0
  %191 = vmatprep.subr.mxu0 0.0
  %192 = vmatpush1.msra.mxu0 0.0
  %193 = vmatprep.subr.mxu0 0.0
  %194 = vmatpush1.msra.mxu0 0.0
  %195 = vmatprep.subr.mxu0 0.0
  %196 = vmatpush1.msra.mxu0 0.0
  %197 = vmatprep.subr.mxu0 0.0
  %198 = vmatpush1.msra.mxu0 0.0
  %199 = vmatprep.subr.mxu0 0.0
  %200 = vmatpush1.msra.mxu0 0.0
  %201 = vmatprep.subr.mxu0 0.0
  %202 = vmatpush1.msra.mxu0 0.0
  %203 = vmatprep.mubr.f32.mxu0 0.0
  %204 = vmatmul.mubr.f32.gmra.mrb[0].mxu0 %v48
  %v205 = vpop.f32.mrb[0].mxu0
  %v206 = vadd.f32 %v39, %v205
  %v207 = vpop.f32.mrb[0].mxu0
  %208 = vmatprep.mubr.f32.mxu0 0.0
  %209 = vmatmul.mubr.f32.gmra.mrb[0].mxu0 %v51
  %v210 = vpop.f32.mrb[0].mxu0
  %v211 = vadd.f32 %v44, %v210
  %v212 = vpop.f32.mrb[0].mxu0
  %213 = vdwg.mxu0
  %v214 = vmax.f32 %v206, 0.0
  %v215 = vmax.f32 %v211, 0.0
  %v216 = vmax.f32 %v128, %v214
  %v217 = vmax.f32 %v129, %v215
  %v218 = vld [vmem:[%s2] sm:$0xff]
  %v219 = vld [vmem:[%s2 + $0x8] sm:$0xff]
  %v220 = vld [vmem:[%s2 + $0x10] sm:$0xff]
  %v221 = vld [vmem:[%s2 + $0x18] sm:$0xff]
  %v222 = vld [vmem:[%s2 + $0x20] sm:$0xff]
  %v223 = vld [vmem:[%s2 + $0x28] sm:$0xff]
  %v224 = vld [vmem:[%s2 + $0x30] sm:$0xff]
  %v225 = vld [vmem:[%s2 + $0x38] sm:$0xff]
  %v226 = vld [vmem:[%s2 + $0x40] sm:$0xff]
  %227 = vmatprep.subr.mxu0 0.0
  %228 = vmatpush1.msra.mxu0 %v218
  %229 = vmatprep.subr.mxu0 0.0
  %230 = vmatpush1.msra.mxu0 %v219
  %231 = vmatprep.subr.mxu0 0.0
  %232 = vmatpush1.msra.mxu0 %v220
  %233 = vmatprep.subr.mxu0 0.0
  %234 = vmatpush1.msra.mxu0 %v221
  %235 = vmatprep.subr.mxu0 0.0
  %236 = vmatpush1.msra.mxu0 %v222
  %237 = vmatprep.subr.mxu0 0.0
  %238 = vmatpush1.msra.mxu0 %v223
  %239 = vmatprep.subr.mxu0 0.0
  %240 = vmatpush1.msra.mxu0 %v224
  %241 = vmatprep.subr.mxu0 0.0
  %242 = vmatpush1.msra.mxu0 %v225
  %243 = vmatprep.subr.mxu0 0.0
  %244 = vmatpush1.msra.mxu0 %v226
  %245 = vmatprep.subr.mxu0 0.0
  %246 = vmatpush1.msra.mxu0 0.0
  %247 = vmatprep.subr.mxu0 0.0
  %248 = vmatpush1.msra.mxu0 0.0
  %249 = vmatprep.subr.mxu0 0.0
  %250 = vmatpush1.msra.mxu0 0.0
  %251 = vmatprep.subr.mxu0 0.0
  %252 = vmatpush1.msra.mxu0 0.0
  %253 = vmatprep.subr.mxu0 0.0
  %254 = vmatpush1.msra.mxu0 0.0
  %255 = vmatprep.subr.mxu0 0.0
  %256 = vmatpush1.msra.mxu0 0.0
  %257 = vmatprep.subr.mxu0 0.0
  %258 = vmatpush1.msra.mxu0 0.0
  %259 = vmatprep.subr.mxu0 0.0
  %260 = vmatpush1.msra.mxu0 0.0
  %261 = vmatprep.subr.mxu0 0.0
  %262 = vmatpush1.msra.mxu0 0.0
  %263 = vmatprep.subr.mxu0 0.0
  %264 = vmatpush1.msra.mxu0 0.0
  %265 = vmatprep.subr.mxu0 0.0
  %266 = vmatpush1.msra.mxu0 0.0
  %267 = vmatprep.subr.mxu0 0.0
  %268 = vmatpush1.msra.mxu0 0.0
  %269 = vmatprep.subr.mxu0 0.0
  %270 = vmatpush1.msra.mxu0 0.0
  %271 = vmatprep.subr.mxu0 0.0
  %272 = vmatpush1.msra.mxu0 0.0
  %273 = vmatprep.subr.mxu0 0.0
  %274 = vmatpush1.msra.mxu0 0.0
  %275 = vmatprep.subr.mxu0 0.0
  %276 = vmatpush1.msra.mxu0 0.0
  %277 = vmatprep.subr.mxu0 0.0
  %278 = vmatpush1.msra.mxu0 0.0
  %279 = vmatprep.subr.mxu0 0.0
  %280 = vmatpush1.msra.mxu0 0.0
  %281 = vmatprep.subr.mxu0 0.0
  %282 = vmatpush1.msra.mxu0 0.0
  %283 = vmatprep.subr.mxu0 0.0
  %284 = vmatpush1.msra.mxu0 0.0
  %285 = vmatprep.subr.mxu0 0.0
  %286 = vmatpush1.msra.mxu0 0.0
  %287 = vmatprep.subr.mxu0 0.0
  %288 = vmatpush1.msra.mxu0 0.0
  %289 = vmatprep.subr.mxu0 0.0
  %290 = vmatpush1.msra.mxu0 0.0
  %291 = vmatprep.mubr.f32.mxu0 0.0
  %292 = vmatmul.mubr.f32.gmra.mrb[0].mxu0 %v48
  %v293 = vpop.f32.mrb[0].mxu0
  %v294 = vadd.f32 %v39, %v293
  %v295 = vpop.f32.mrb[0].mxu0
  %296 = vmatprep.mubr.f32.mxu0 0.0
  %297 = vmatmul.mubr.f32.gmra.mrb[0].mxu0 %v51
  %v298 = vpop.f32.mrb[0].mxu0
  %v299 = vadd.f32 %v44, %v298
  %v300 = vpop.f32.mrb[0].mxu0
  %301 = vdwg.mxu0
  %v302 = vmax.f32 %v294, 0.0
  %v303 = vmax.f32 %v299, 0.0
  %v304 = vld [vmem:[%s3] sm:$0xff]
  %v305 = vld [vmem:[%s3 + $0x8] sm:$0xff]
  %v306 = vld [vmem:[%s3 + $0x10] sm:$0xff]
  %v307 = vld [vmem:[%s3 + $0x18] sm:$0xff]
  %v308 = vld [vmem:[%s3 + $0x20] sm:$0xff]
  %v309 = vld [vmem:[%s3 + $0x28] sm:$0xff]
  %v310 = vld [vmem:[%s3 + $0x30] sm:$0xff]
  %v311 = vld [vmem:[%s3 + $0x38] sm:$0xff]
  %v312 = vld [vmem:[%s3 + $0x40] sm:$0xff]
  %313 = vmatprep.subr.mxu0 0.0
  %314 = vmatpush1.msra.mxu0 %v304
  %315 = vmatprep.subr.mxu0 0.0
  %316 = vmatpush1.msra.mxu0 %v305
  %317 = vmatprep.subr.mxu0 0.0
  %318 = vmatpush1.msra.mxu0 %v306
  %319 = vmatprep.subr.mxu0 0.0
  %320 = vmatpush1.msra.mxu0 %v307
  %321 = vmatprep.subr.mxu0 0.0
  %322 = vmatpush1.msra.mxu0 %v308
  %323 = vmatprep.subr.mxu0 0.0
  %324 = vmatpush1.msra.mxu0 %v309
  %325 = vmatprep.subr.mxu0 0.0
  %326 = vmatpush1.msra.mxu0 %v310
  %327 = vmatprep.subr.mxu0 0.0
  %328 = vmatpush1.msra.mxu0 %v311
  %329 = vmatprep.subr.mxu0 0.0
  %330 = vmatpush1.msra.mxu0 %v312
  %331 = vmatprep.subr.mxu0 0.0
  %332 = vmatpush1.msra.mxu0 0.0
  %333 = vmatprep.subr.mxu0 0.0
  %334 = vmatpush1.msra.mxu0 0.0
  %335 = vmatprep.subr.mxu0 0.0
  %336 = vmatpush1.msra.mxu0 0.0
  %337 = vmatprep.subr.mxu0 0.0
  %338 = vmatpush1.msra.mxu0 0.0
  %339 = vmatprep.subr.mxu0 0.0
  %340 = vmatpush1.msra.mxu0 0.0
  %341 = vmatprep.subr.mxu0 0.0
  %342 = vmatpush1.msra.mxu0 0.0
  %343 = vmatprep.subr.mxu0 0.0
  %344 = vmatpush1.msra.mxu0 0.0
  %345 = vmatprep.subr.mxu0 0.0
  %346 = vmatpush1.msra.mxu0 0.0
  %347 = vmatprep.subr.mxu0 0.0
  %348 = vmatpush1.msra.mxu0 0.0
  %349 = vmatprep.subr.mxu0 0.0
  %350 = vmatpush1.msra.mxu0 0.0
  %351 = vmatprep.subr.mxu0 0.0
  %352 = vmatpush1.msra.mxu0 0.0
  %353 = vmatprep.subr.mxu0 0.0
  %354 = vmatpush1.msra.mxu0 0.0
  %355 = vmatprep.subr.mxu0 0.0
  %356 = vmatpush1.msra.mxu0 0.0
  %357 = vmatprep.subr.mxu0 0.0
  %358 = vmatpush1.msra.mxu0 0.0
  %359 = vmatprep.subr.mxu0 0.0
  %360 = vmatpush1.msra.mxu0 0.0
  %361 = vmatprep.subr.mxu0 0.0
  %362 = vmatpush1.msra.mxu0 0.0
  %363 = vmatprep.subr.mxu0 0.0
  %364 = vmatpush1.msra.mxu0 0.0
  %365 = vmatprep.subr.mxu0 0.0
  %366 = vmatpush1.msra.mxu0 0.0
  %367 = vmatprep.subr.mxu0 0.0
  %368 = vmatpush1.msra.mxu0 0.0
  %369 = vmatprep.subr.mxu0 0.0
  %370 = vmatpush1.msra.mxu0 0.0
  %371 = vmatprep.subr.mxu0 0.0
  %372 = vmatpush1.msra.mxu0 0.0
  %373 = vmatprep.subr.mxu0 0.0
  %374 = vmatpush1.msra.mxu0 0.0
  %375 = vmatprep.subr.mxu0 0.0
  %376 = vmatpush1.msra.mxu0 0.0
  %377 = vmatprep.mubr.f32.mxu0 0.0
  %378 = vmatmul.mubr.f32.gmra.mrb[0].mxu0 %v48
  %v379 = vpop.f32.mrb[0].mxu0
  %v380 = vadd.f32 %v39, %v379
  %v381 = vpop.f32.mrb[0].mxu0
  %382 = vmatprep.mubr.f32.mxu0 0.0
  %383 = vmatmul.mubr.f32.gmra.mrb[0].mxu0 %v51
  %v384 = vpop.f32.mrb[0].mxu0
  %v385 = vadd.f32 %v44, %v384
  %v386 = vpop.f32.mrb[0].mxu0
  %387 = vdwg.mxu0
  %v388 = vmax.f32 %v380, 0.0
  %v389 = vmax.f32 %v385, 0.0
  %v390 = vmax.f32 %v302, %v388
  %v391 = vmax.f32 %v303, %v389
  %v392 = vmax.f32 %v216, %v390
  %v393 = vmax.f32 %v217, %v391
  %394 = vst [vmem:[%s6] sm:$0xff] %v392
  %395 = vst [vmem:[%s6 + $0x8] sm:$0xff] %v393
  // Predicated region
  $region26: #{convnet_forward.4} parent=0 // pred_check
    _
  $region27: #{convnet_forward.4} parent=0 // pred_check_branch
    %397 = sbr.rel (0) target = $region29
  $region28: #{convnet_forward.4} parent=0 // pred_region
    _
  $region29: #{convnet_forward.4} parent=0 // pred_fallthru
    _
  // Predicated region
  $region30: #{convnet_forward.4} parent=0 // pred_check
    _
  $region31: #{convnet_forward.4} parent=0 // pred_check_branch
    %399 = sbr.rel (0) target = $region33
  $region32: #{convnet_forward.4} parent=0 // pred_region
    _
  $region33: #{convnet_forward.4} parent=0 // pred_fallthru
    _

// kernel: convnet_forward.5
$region0: #{convnet_forward.5}
  #allocation0 [shape = 'u32[]', space=smem, size = 0x4, offset = 0x4, fixed_abs, tag = 'smem constant byte address 0x4 - core index']
  #allocation1 [shape = 'u32[144,128]{1,0:T(1,128)}', space=vmem, size = 0x12000, scoped, tag = 'internal scratch']
  %s0 = inlined_call_operand.vmem [shape: f32[8,784], index: 0, kind: input, shape index: {}]
  %s1 = inlined_call_operand.vmem [shape: f32[784,128], index: 1, kind: input, shape index: {}]
  %s2 = inlined_call_operand.vmem [shape: f32[1,128], index: 2, kind: input, shape index: {}]
  %s3 = inlined_call_operand.vmem [shape: f32[128,128], index: 3, kind: input, shape index: {}]
  %s4 = inlined_call_operand.vmem [shape: f32[1,128], index: 4, kind: input, shape index: {}]
  %s5 = inlined_call_operand.vmem [shape: f32[8,128], index: 5, kind: output, shape index: {}]
  %s6 = sld [smem:[#allocation0]]
  $region30: #{convnet_forward.5} parent=0
    _
  %s8 = ssub.s32 1, %s6
  %s9 = scalar_select 0, %s8, %s6
  // Predicated region
  $region2: #{convnet_forward.5} parent=0 // pred_check
    _
  $region3: #{convnet_forward.5} parent=0 // pred_check_branch
    %11 = sbr.rel (0) target = $region5
  $region4: #{convnet_forward.5} parent=0 // pred_region
    _
  $region5: #{convnet_forward.5} parent=0 // pred_fallthru
    _
  // Predicated region
  $region6: #{convnet_forward.5} parent=0 // pred_check
    _
  $region7: #{convnet_forward.5} parent=0 // pred_check_branch
    %13 = sbr.rel (0) target = $region9
  $region8: #{convnet_forward.5} parent=0 // pred_region
    _
  $region9: #{convnet_forward.5} parent=0 // pred_fallthru
    _
  // Predicated region
  $region10: #{convnet_forward.5} parent=0 // pred_check
    _
  $region11: #{convnet_forward.5} parent=0 // pred_check_branch
    %15 = sbr.rel (0) target = $region13
  $region12: #{convnet_forward.5} parent=0 // pred_region
    _
  $region13: #{convnet_forward.5} parent=0 // pred_fallthru
    _
  // Predicated region
  $region14: #{convnet_forward.5} parent=0 // pred_check
    _
  $region15: #{convnet_forward.5} parent=0 // pred_check_branch
    %17 = sbr.rel (0) target = $region17
  $region16: #{convnet_forward.5} parent=0 // pred_region
    _
  $region17: #{convnet_forward.5} parent=0 // pred_fallthru
    _
  // Predicated region
  $region18: #{convnet_forward.5} parent=0 // pred_check
    _
  $region19: #{convnet_forward.5} parent=0 // pred_check_branch
    %19 = sbr.rel (0) target = $region21
  $region20: #{convnet_forward.5} parent=0 // pred_region
    _
  $region21: #{convnet_forward.5} parent=0 // pred_fallthru
    _
  %v20 = vld [vmem:[%s0] sm:$0xff]
  %v21 = vld [vmem:[%s0 + $0x8] sm:$0xff]
  %v22 = vld [vmem:[%s0 + $0x10] sm:$0xff]
  %v23 = vld [vmem:[%s0 + $0x18] sm:$0xff]
  %v24 = vld [vmem:[%s0 + $0x20] sm:$0xff]
  %v25 = vld [vmem:[%s0 + $0x28] sm:$0xff]
  %v26 = vld [vmem:[%s0 + $0x30] sm:$0xff]
  %v27 = vld [vmem:[%s1] sm:$0xff]
  %v28 = vld [vmem:[%s1 + $0x8] sm:$0xff]
  %v29 = vld [vmem:[%s1 + $0x10] sm:$0xff]
  %v30 = vld [vmem:[%s1 + $0x18] sm:$0xff]
  %v31 = vld [vmem:[%s1 + $0x20] sm:$0xff]
  %v32 = vld [vmem:[%s1 + $0x28] sm:$0xff]
  %v33 = vld [vmem:[%s1 + $0x30] sm:$0xff]
  %v34 = vld [vmem:[%s1 + $0x38] sm:$0xff]
  %v35 = vld [vmem:[%s1 + $0x40] sm:$0xff]
  %v36 = vld [vmem:[%s1 + $0x48] sm:$0xff]
  %v37 = vld [vmem:[%s1 + $0x50] sm:$0xff]
  %v38 = vld [vmem:[%s1 + $0x58] sm:$0xff]
  %v39 = vld [vmem:[%s1 + $0x60] sm:$0xff]
  %v40 = vld [vmem:[%s1 + $0x68] sm:$0xff]
  %v41 = vld [vmem:[%s1 + $0x70] sm:$0xff]
  %v42 = vld [vmem:[%s1 + $0x78] sm:$0xff]
  %v43 = vld [vmem:[%s1 + $0x80] sm:$0xff]
  %v44 = vld [vmem:[%s1 + $0x88] sm:$0xff]
  %v45 = vld [vmem:[%s1 + $0x90] sm:$0xff]
  %v46 = vld [vmem:[%s1 + $0x98] sm:$0xff]
  %v47 = vld [vmem:[%s1 + $0xa0] sm:$0xff]
  %v48 = vld [vmem:[%s1 + $0xa8] sm:$0xff]
  %v49 = vld [vmem:[%s1 + $0xb0] sm:$0xff]
  %v50 = vld [vmem:[%s1 + $0xb8] sm:$0xff]
  %v51 = vld [vmem:[%s1 + $0xc0] sm:$0xff]
  %v52 = vld [vmem:[%s1 + $0xc8] sm:$0xff]
  %v53 = vld [vmem:[%s1 + $0xd0] sm:$0xff]
  %v54 = vld [vmem:[%s1 + $0xd8] sm:$0xff]
  %v55 = vld [vmem:[%s1 + $0xe0] sm:$0xff]
  %v56 = vld [vmem:[%s1 + $0xe8] sm:$0xff]
  %v57 = vld [vmem:[%s1 + $0xf0] sm:$0xff]
  %v58 = vld [vmem:[%s1 + $0xf8] sm:$0xff]
  %v59 = vld [vmem:[%s1 + $0x100] sm:$0xff]
  %v60 = vld [vmem:[%s1 + $0x108] sm:$0xff]
  %v61 = vld [vmem:[%s1 + $0x110] sm:$0xff]
  %v62 = vld [vmem:[%s1 + $0x118] sm:$0xff]
  %v63 = vld [vmem:[%s1 + $0x120] sm:$0xff]
  %v64 = vld [vmem:[%s1 + $0x128] sm:$0xff]
  %v65 = vld [vmem:[%s1 + $0x130] sm:$0xff]
  %v66 = vld [vmem:[%s1 + $0x138] sm:$0xff]
  %v67 = vld [vmem:[%s1 + $0x140] sm:$0xff]
  %v68 = vld [vmem:[%s1 + $0x148] sm:$0xff]
  %v69 = vld [vmem:[%s1 + $0x150] sm:$0xff]
  %v70 = vld [vmem:[%s1 + $0x158] sm:$0xff]
  %v71 = vld [vmem:[%s1 + $0x160] sm:$0xff]
  %v72 = vld [vmem:[%s1 + $0x168] sm:$0xff]
  %v73 = vld [vmem:[%s1 + $0x170] sm:$0xff]
  %v74 = vld [vmem:[%s1 + $0x178] sm:$0xff]
  %v75 = vld [vmem:[%s1 + $0x180] sm:$0xff]
  %v76 = vld [vmem:[%s1 + $0x188] sm:$0xff]
  %v77 = vld [vmem:[%s1 + $0x190] sm:$0xff]
  %v78 = vld [vmem:[%s1 + $0x198] sm:$0xff]
  %v79 = vld [vmem:[%s1 + $0x1a0] sm:$0xff]
  %v80 = vld [vmem:[%s1 + $0x1a8] sm:$0xff]
  %v81 = vld [vmem:[%s1 + $0x1b0] sm:$0xff]
  %v82 = vld [vmem:[%s1 + $0x1b8] sm:$0xff]
  %v83 = vld [vmem:[%s1 + $0x1c0] sm:$0xff]
  %v84 = vld [vmem:[%s1 + $0x1c8] sm:$0xff]
  %v85 = vld [vmem:[%s1 + $0x1d0] sm:$0xff]
  %v86 = vld [vmem:[%s1 + $0x1d8] sm:$0xff]
  %v87 = vld [vmem:[%s1 + $0x1e0] sm:$0xff]
  %v88 = vld [vmem:[%s1 + $0x1e8] sm:$0xff]
  %v89 = vld [vmem:[%s1 + $0x1f0] sm:$0xff]
  %v90 = vld [vmem:[%s1 + $0x1f8] sm:$0xff]
  %v91 = vld [vmem:[%s1 + $0x200] sm:$0xff]
  %v92 = vld [vmem:[%s1 + $0x208] sm:$0xff]
  %v93 = vld [vmem:[%s1 + $0x210] sm:$0xff]
  %v94 = vld [vmem:[%s1 + $0x218] sm:$0xff]
  %v95 = vld [vmem:[%s1 + $0x220] sm:$0xff]
  %v96 = vld [vmem:[%s1 + $0x228] sm:$0xff]
  %v97 = vld [vmem:[%s1 + $0x230] sm:$0xff]
  %v98 = vld [vmem:[%s1 + $0x238] sm:$0xff]
  %v99 = vld [vmem:[%s1 + $0x240] sm:$0xff]
  %v100 = vld [vmem:[%s1 + $0x248] sm:$0xff]
  %v101 = vld [vmem:[%s1 + $0x250] sm:$0xff]
  %v102 = vld [vmem:[%s1 + $0x258] sm:$0xff]
  %v103 = vld [vmem:[%s1 + $0x260] sm:$0xff]
  %v104 = vld [vmem:[%s1 + $0x268] sm:$0xff]
  %v105 = vld [vmem:[%s1 + $0x270] sm:$0xff]
  %v106 = vld [vmem:[%s1 + $0x278] sm:$0xff]
  %v107 = vld [vmem:[%s1 + $0x280] sm:$0xff]
  %v108 = vld [vmem:[%s1 + $0x288] sm:$0xff]
  %v109 = vld [vmem:[%s1 + $0x290] sm:$0xff]
  %v110 = vld [vmem:[%s1 + $0x298] sm:$0xff]
  %v111 = vld [vmem:[%s1 + $0x2a0] sm:$0xff]
  %v112 = vld [vmem:[%s1 + $0x2a8] sm:$0xff]
  %v113 = vld [vmem:[%s1 + $0x2b0] sm:$0xff]
  %v114 = vld [vmem:[%s1 + $0x2b8] sm:$0xff]
  %v115 = vld [vmem:[%s1 + $0x2c0] sm:$0xff]
  %v116 = vld [vmem:[%s1 + $0x2c8] sm:$0xff]
  %v117 = vld [vmem:[%s1 + $0x2d0] sm:$0xff]
  %v118 = vld [vmem:[%s1 + $0x2d8] sm:$0xff]
  %v119 = vld [vmem:[%s1 + $0x2e0] sm:$0xff]
  %v120 = vld [vmem:[%s1 + $0x2e8] sm:$0xff]
  %v121 = vld [vmem:[%s1 + $0x2f0] sm:$0xff]
  %v122 = vld [vmem:[%s1 + $0x2f8] sm:$0xff]
  %v123 = vld [vmem:[%s1 + $0x300] sm:$0xff]
  %v124 = vld [vmem:[%s1 + $0x308] sm:$0xff]
  %v125 = vld [vmem:[%s2] sm:$0x1]
  %v127 = vlaneseq
  %v128 = vshrl.u32 %v127, 7
  %v129 = vsub.s32 0, %v128
  %v130 = vrot.slane %v125, %v129
  %vm132 = vcmask 130048
  %v134 = vsel %vm132, %v26, 0
  %136 = vmatprep.subr.mxu0 0.0
  %137 = vmatpush1.msra.mxu0 %v27
  %138 = vmatprep.subr.mxu0 0.0
  %139 = vmatpush1.msra.mxu0 %v28
  %140 = vmatprep.subr.mxu0 0.0
  %141 = vmatpush1.msra.mxu0 %v29
  %142 = vmatprep.subr.mxu0 0.0
  %143 = vmatpush1.msra.mxu0 %v30
  %144 = vmatprep.subr.mxu0 0.0
  %145 = vmatpush1.msra.mxu0 %v31
  %146 = vmatprep.subr.mxu0 0.0
  %147 = vmatpush1.msra.mxu0 %v32
  %148 = vmatprep.subr.mxu0 0.0
  %149 = vmatpush1.msra.mxu0 %v33
  %150 = vmatprep.subr.mxu0 0.0
  %151 = vmatpush1.msra.mxu0 %v34
  %152 = vmatprep.subr.mxu0 0.0
  %153 = vmatpush1.msra.mxu0 %v35
  %154 = vmatprep.subr.mxu0 0.0
  %155 = vmatpush1.msra.mxu0 %v36
  %156 = vmatprep.subr.mxu0 0.0
  %157 = vmatpush1.msra.mxu0 %v37
  %158 = vmatprep.subr.mxu0 0.0
  %159 = vmatpush1.msra.mxu0 %v38
  %160 = vmatprep.subr.mxu0 0.0
  %161 = vmatpush1.msra.mxu0 %v39
  %162 = vmatprep.subr.mxu0 0.0
  %163 = vmatpush1.msra.mxu0 %v40
  %164 = vmatprep.subr.mxu0 0.0
  %165 = vmatpush1.msra.mxu0 %v41
  %166 = vmatprep.subr.mxu0 0.0
  %167 = vmatpush1.msra.mxu0 %v42
  %168 = vmatprep.subr.mxu0 0.0
  %169 = vmatpush1.msra.mxu0 %v43
  %170 = vmatprep.subr.mxu0 0.0
  %171 = vmatpush1.msra.mxu0 %v44
  %172 = vmatprep.subr.mxu0 0.0
  %173 = vmatpush1.msra.mxu0 %v45
  %174 = vmatprep.subr.mxu0 0.0
  %175 = vmatpush1.msra.mxu0 %v46
  %176 = vmatprep.subr.mxu0 0.0
  %177 = vmatpush1.msra.mxu0 %v47
  %178 = vmatprep.subr.mxu0 0.0
  %179 = vmatpush1.msra.mxu0 %v48
  %180 = vmatprep.subr.mxu0 0.0
  %181 = vmatpush1.msra.mxu0 %v49
  %182 = vmatprep.subr.mxu0 0.0
  %183 = vmatpush1.msra.mxu0 %v50
  %184 = vmatprep.subr.mxu0 0.0
  %185 = vmatpush1.msra.mxu0 %v51
  %186 = vmatprep.subr.mxu0 0.0
  %187 = vmatpush1.msra.mxu0 %v52
  %188 = vmatprep.subr.mxu0 0.0
  %189 = vmatpush1.msra.mxu0 %v53
  %190 = vmatprep.subr.mxu0 0.0
  %191 = vmatpush1.msra.mxu0 %v54
  %192 = vmatprep.subr.mxu0 0.0
  %193 = vmatpush1.msra.mxu0 %v55
  %194 = vmatprep.subr.mxu0 0.0
  %195 = vmatpush1.msra.mxu0 %v56
  %196 = vmatprep.subr.mxu0 0.0
  %197 = vmatpush1.msra.mxu0 %v57
  %198 = vmatprep.subr.mxu0 0.0
  %199 = vmatpush1.msra.mxu0 %v58
  %200 = vmatprep.mubr.f32.mxu0 %v21
  %201 = vmatmul.mubr.f32.gmra.mrb[0].mxu0 %v20
  %v202 = vpop.f32.mrb[0].mxu0
  %v203 = vadd.f32 %v130, %v202
  %v204 = vpop.f32.mrb[0].mxu0
  %205 = vdwg.mxu0
  %206 = vmatprep.subr.mxu0 0.0
  %207 = vmatpush1.msra.mxu0 %v59
  %208 = vmatprep.subr.mxu0 0.0
  %209 = vmatpush1.msra.mxu0 %v60
  %210 = vmatprep.subr.mxu0 0.0
  %211 = vmatpush1.msra.mxu0 %v61
  %212 = vmatprep.subr.mxu0 0.0
  %213 = vmatpush1.msra.mxu0 %v62
  %214 = vmatprep.subr.mxu0 0.0
  %215 = vmatpush1.msra.mxu0 %v63
  %216 = vmatprep.subr.mxu0 0.0
  %217 = vmatpush1.msra.mxu0 %v64
  %218 = vmatprep.subr.mxu0 0.0
  %219 = vmatpush1.msra.mxu0 %v65
  %220 = vmatprep.subr.mxu0 0.0
  %221 = vmatpush1.msra.mxu0 %v66
  %222 = vmatprep.subr.mxu0 0.0
  %223 = vmatpush1.msra.mxu0 %v67
  %224 = vmatprep.subr.mxu0 0.0
  %225 = vmatpush1.msra.mxu0 %v68
  %226 = vmatprep.subr.mxu0 0.0
  %227 = vmatpush1.msra.mxu0 %v69
  %228 = vmatprep.subr.mxu0 0.0
  %229 = vmatpush1.msra.mxu0 %v70
  %230 = vmatprep.subr.mxu0 0.0
  %231 = vmatpush1.msra.mxu0 %v71
  %232 = vmatprep.subr.mxu0 0.0
  %233 = vmatpush1.msra.mxu0 %v72
  %234 = vmatprep.subr.mxu0 0.0
  %235 = vmatpush1.msra.mxu0 %v73
  %236 = vmatprep.subr.mxu0 0.0
  %237 = vmatpush1.msra.mxu0 %v74
  %238 = vmatprep.subr.mxu0 0.0
  %239 = vmatpush1.msra.mxu0 %v75
  %240 = vmatprep.subr.mxu0 0.0
  %241 = vmatpush1.msra.mxu0 %v76
  %242 = vmatprep.subr.mxu0 0.0
  %243 = vmatpush1.msra.mxu0 %v77
  %244 = vmatprep.subr.mxu0 0.0
  %245 = vmatpush1.msra.mxu0 %v78
  %246 = vmatprep.subr.mxu0 0.0
  %247 = vmatpush1.msra.mxu0 %v79
  %248 = vmatprep.subr.mxu0 0.0
  %249 = vmatpush1.msra.mxu0 %v80
  %250 = vmatprep.subr.mxu0 0.0
  %251 = vmatpush1.msra.mxu0 %v81
  %252 = vmatprep.subr.mxu0 0.0
  %253 = vmatpush1.msra.mxu0 %v82
  %254 = vmatprep.subr.mxu0 0.0
  %255 = vmatpush1.msra.mxu0 %v83
  %256 = vmatprep.subr.mxu0 0.0
  %257 = vmatpush1.msra.mxu0 %v84
  %258 = vmatprep.subr.mxu0 0.0
  %259 = vmatpush1.msra.mxu0 %v85
  %260 = vmatprep.subr.mxu0 0.0
  %261 = vmatpush1.msra.mxu0 %v86
  %262 = vmatprep.subr.mxu0 0.0
  %263 = vmatpush1.msra.mxu0 %v87
  %264 = vmatprep.subr.mxu0 0.0
  %265 = vmatpush1.msra.mxu0 %v88
  %266 = vmatprep.subr.mxu0 0.0
  %267 = vmatpush1.msra.mxu0 %v89
  %268 = vmatprep.subr.mxu0 0.0
  %269 = vmatpush1.msra.mxu0 %v90
  %270 = vmatprep.mubr.f32.mxu0 %v23
  %271 = vmatmul.mubr.f32.gmra.mrb[0].mxu0 %v22
  %v272 = vpop.f32.mrb[0].mxu0
  %v273 = vadd.f32 %v203, %v272
  %v274 = vpop.f32.mrb[0].mxu0
  %275 = vdwg.mxu0
  %276 = vmatprep.subr.mxu0 0.0
  %277 = vmatpush1.msra.mxu0 %v91
  %278 = vmatprep.subr.mxu0 0.0
  %279 = vmatpush1.msra.mxu0 %v92
  %280 = vmatprep.subr.mxu0 0.0
  %281 = vmatpush1.msra.mxu0 %v93
  %282 = vmatprep.subr.mxu0 0.0
  %283 = vmatpush1.msra.mxu0 %v94
  %284 = vmatprep.subr.mxu0 0.0
  %285 = vmatpush1.msra.mxu0 %v95
  %286 = vmatprep.subr.mxu0 0.0
  %287 = vmatpush1.msra.mxu0 %v96
  %288 = vmatprep.subr.mxu0 0.0
  %289 = vmatpush1.msra.mxu0 %v97
  %290 = vmatprep.subr.mxu0 0.0
  %291 = vmatpush1.msra.mxu0 %v98
  %292 = vmatprep.subr.mxu0 0.0
  %293 = vmatpush1.msra.mxu0 %v99
  %294 = vmatprep.subr.mxu0 0.0
  %295 = vmatpush1.msra.mxu0 %v100
  %296 = vmatprep.subr.mxu0 0.0
  %297 = vmatpush1.msra.mxu0 %v101
  %298 = vmatprep.subr.mxu0 0.0
  %299 = vmatpush1.msra.mxu0 %v102
  %300 = vmatprep.subr.mxu0 0.0
  %301 = vmatpush1.msra.mxu0 %v103
  %302 = vmatprep.subr.mxu0 0.0
  %303 = vmatpush1.msra.mxu0 %v104
  %304 = vmatprep.subr.mxu0 0.0
  %305 = vmatpush1.msra.mxu0 %v105
  %306 = vmatprep.subr.mxu0 0.0
  %307 = vmatpush1.msra.mxu0 %v106
  %308 = vmatprep.subr.mxu0 0.0
  %309 = vmatpush1.msra.mxu0 %v107
  %310 = vmatprep.subr.mxu0 0.0
  %311 = vmatpush1.msra.mxu0 %v108
  %312 = vmatprep.subr.mxu0 0.0
  %313 = vmatpush1.msra.mxu0 %v109
  %314 = vmatprep.subr.mxu0 0.0
  %315 = vmatpush1.msra.mxu0 %v110
  %316 = vmatprep.subr.mxu0 0.0
  %317 = vmatpush1.msra.mxu0 %v111
  %318 = vmatprep.subr.mxu0 0.0
  %319 = vmatpush1.msra.mxu0 %v112
  %320 = vmatprep.subr.mxu0 0.0
  %321 = vmatpush1.msra.mxu0 %v113
  %322 = vmatprep.subr.mxu0 0.0
  %323 = vmatpush1.msra.mxu0 %v114
  %324 = vmatprep.subr.mxu0 0.0
  %325 = vmatpush1.msra.mxu0 %v115
  %326 = vmatprep.subr.mxu0 0.0
  %327 = vmatpush1.msra.mxu0 %v116
  %328 = vmatprep.subr.mxu0 0.0
  %329 = vmatpush1.msra.mxu0 %v117
  %330 = vmatprep.subr.mxu0 0.0
  %331 = vmatpush1.msra.mxu0 %v118
  %332 = vmatprep.subr.mxu0 0.0
  %333 = vmatpush1.msra.mxu0 %v119
  %334 = vmatprep.subr.mxu0 0.0
  %335 = vmatpush1.msra.mxu0 %v120
  %336 = vmatprep.subr.mxu0 0.0
  %337 = vmatpush1.msra.mxu0 %v121
  %338 = vmatprep.subr.mxu0 0.0
  %339 = vmatpush1.msra.mxu0 %v122
  %340 = vmatprep.mubr.f32.mxu0 %v25
  %341 = vmatmul.mubr.f32.gmra.mrb[0].mxu0 %v24
  %v342 = vpop.f32.mrb[0].mxu0
  %v343 = vadd.f32 %v273, %v342
  %v344 = vpop.f32.mrb[0].mxu0
  %345 = vdwg.mxu0
  %346 = vmatprep.subr.mxu0 0.0
  %347 = vmatpush1.msra.mxu0 %v123
  %348 = vmatprep.subr.mxu0 0.0
  %349 = vmatpush1.msra.mxu0 %v124
  %350 = vmatprep.subr.mxu0 0.0
  %351 = vmatpush1.msra.mxu0 0.0
  %352 = vmatprep.subr.mxu0 0.0
  %353 = vmatpush1.msra.mxu0 0.0
  %354 = vmatprep.subr.mxu0 0.0
  %355 = vmatpush1.msra.mxu0 0.0
  %356 = vmatprep.subr.mxu0 0.0
  %357 = vmatpush1.msra.mxu0 0.0
  %358 = vmatprep.subr.mxu0 0.0
  %359 = vmatpush1.msra.mxu0 0.0
  %360 = vmatprep.subr.mxu0 0.0
  %361 = vmatpush1.msra.mxu0 0.0
  %362 = vmatprep.subr.mxu0 0.0
  %363 = vmatpush1.msra.mxu0 0.0
  %364 = vmatprep.subr.mxu0 0.0
  %365 = vmatpush1.msra.mxu0 0.0
  %366 = vmatprep.subr.mxu0 0.0
  %367 = vmatpush1.msra.mxu0 0.0
  %368 = vmatprep.subr.mxu0 0.0
  %369 = vmatpush1.msra.mxu0 0.0
  %370 = vmatprep.subr.mxu0 0.0
  %371 = vmatpush1.msra.mxu0 0.0
  %372 = vmatprep.subr.mxu0 0.0
  %373 = vmatpush1.msra.mxu0 0.0
  %374 = vmatprep.subr.mxu0 0.0
  %375 = vmatpush1.msra.mxu0 0.0
  %376 = vmatprep.subr.mxu0 0.0
  %377 = vmatpush1.msra.mxu0 0.0
  %378 = vmatprep.subr.mxu0 0.0
  %379 = vmatpush1.msra.mxu0 0.0
  %380 = vmatprep.subr.mxu0 0.0
  %381 = vmatpush1.msra.mxu0 0.0
  %382 = vmatprep.subr.mxu0 0.0
  %383 = vmatpush1.msra.mxu0 0.0
  %384 = vmatprep.subr.mxu0 0.0
  %385 = vmatpush1.msra.mxu0 0.0
  %386 = vmatprep.subr.mxu0 0.0
  %387 = vmatpush1.msra.mxu0 0.0
  %388 = vmatprep.subr.mxu0 0.0
  %389 = vmatpush1.msra.mxu0 0.0
  %390 = vmatprep.subr.mxu0 0.0
  %391 = vmatpush1.msra.mxu0 0.0
  %392 = vmatprep.subr.mxu0 0.0
  %393 = vmatpush1.msra.mxu0 0.0
  %394 = vmatprep.subr.mxu0 0.0
  %395 = vmatpush1.msra.mxu0 0.0
  %396 = vmatprep.subr.mxu0 0.0
  %397 = vmatpush1.msra.mxu0 0.0
  %398 = vmatprep.subr.mxu0 0.0
  %399 = vmatpush1.msra.mxu0 0.0
  %400 = vmatprep.subr.mxu0 0.0
  %401 = vmatpush1.msra.mxu0 0.0
  %402 = vmatprep.subr.mxu0 0.0
  %403 = vmatpush1.msra.mxu0 0.0
  %404 = vmatprep.subr.mxu0 0.0
  %405 = vmatpush1.msra.mxu0 0.0
  %406 = vmatprep.subr.mxu0 0.0
  %407 = vmatpush1.msra.mxu0 0.0
  %408 = vmatprep.subr.mxu0 0.0
  %409 = vmatpush1.msra.mxu0 0.0
  %410 = vmatprep.mubr.f32.mxu0 0.0
  %411 = vmatmul.mubr.f32.gmra.mrb[0].mxu0 %v134
  %v412 = vpop.f32.mrb[0].mxu0
  %v413 = vadd.f32 %v343, %v412
  %v414 = vpop.f32.mrb[0].mxu0
  %415 = vdwg.mxu0
  %v416 = vld [vmem:[%s3] sm:$0xff]
  %v417 = vld [vmem:[%s3 + $0x8] sm:$0xff]
  %v418 = vld [vmem:[%s3 + $0x10] sm:$0xff]
  %v419 = vld [vmem:[%s3 + $0x18] sm:$0xff]
  %v420 = vld [vmem:[%s3 + $0x20] sm:$0xff]
  %v421 = vld [vmem:[%s3 + $0x28] sm:$0xff]
  %v422 = vld [vmem:[%s3 + $0x30] sm:$0xff]
  %v423 = vld [vmem:[%s3 + $0x38] sm:$0xff]
  %v424 = vld [vmem:[%s3 + $0x40] sm:$0xff]
  %v425 = vld [vmem:[%s3 + $0x48] sm:$0xff]
  %v426 = vld [vmem:[%s3 + $0x50] sm:$0xff]
  %v427 = vld [vmem:[%s3 + $0x58] sm:$0xff]
  %v428 = vld [vmem:[%s3 + $0x60] sm:$0xff]
  %v429 = vld [vmem:[%s3 + $0x68] sm:$0xff]
  %v430 = vld [vmem:[%s3 + $0x70] sm:$0xff]
  %v431 = vld [vmem:[%s3 + $0x78] sm:$0xff]
  %v432 = vld [vmem:[%s4] sm:$0x1]
  %v434 = vlaneseq
  %v435 = vshrl.u32 %v434, 7
  %v436 = vsub.s32 0, %v435
  %v437 = vrot.slane %v432, %v436
  %439 = vmatprep.subr.mxu0 0.0
  %440 = vmatpush1.msra.mxu0 %v416
  %441 = vmatprep.subr.mxu0 0.0
  %442 = vmatpush1.msra.mxu0 %v417
  %443 = vmatprep.subr.mxu0 0.0
  %444 = vmatpush1.msra.mxu0 %v418
  %445 = vmatprep.subr.mxu0 0.0
  %446 = vmatpush1.msra.mxu0 %v419
  %447 = vmatprep.subr.mxu0 0.0
  %448 = vmatpush1.msra.mxu0 %v420
  %449 = vmatprep.subr.mxu0 0.0
  %450 = vmatpush1.msra.mxu0 %v421
  %451 = vmatprep.subr.mxu0 0.0
  %452 = vmatpush1.msra.mxu0 %v422
  %453 = vmatprep.subr.mxu0 0.0
  %454 = vmatpush1.msra.mxu0 %v423
  %455 = vmatprep.subr.mxu0 0.0
  %456 = vmatpush1.msra.mxu0 %v424
  %457 = vmatprep.subr.mxu0 0.0
  %458 = vmatpush1.msra.mxu0 %v425
  %459 = vmatprep.subr.mxu0 0.0
  %460 = vmatpush1.msra.mxu0 %v426
  %461 = vmatprep.subr.mxu0 0.0
  %462 = vmatpush1.msra.mxu0 %v427
  %463 = vmatprep.subr.mxu0 0.0
  %464 = vmatpush1.msra.mxu0 %v428
  %465 = vmatprep.subr.mxu0 0.0
  %466 = vmatpush1.msra.mxu0 %v429
  %467 = vmatprep.subr.mxu0 0.0
  %468 = vmatpush1.msra.mxu0 %v430
  %469 = vmatprep.subr.mxu0 0.0
  %470 = vmatpush1.msra.mxu0 %v431
  %471 = vmatprep.subr.mxu0 0.0
  %472 = vmatpush1.msra.mxu0 0.0
  %473 = vmatprep.subr.mxu0 0.0
  %474 = vmatpush1.msra.mxu0 0.0
  %475 = vmatprep.subr.mxu0 0.0
  %476 = vmatpush1.msra.mxu0 0.0
  %477 = vmatprep.subr.mxu0 0.0
  %478 = vmatpush1.msra.mxu0 0.0
  %479 = vmatprep.subr.mxu0 0.0
  %480 = vmatpush1.msra.mxu0 0.0
  %481 = vmatprep.subr.mxu0 0.0
  %482 = vmatpush1.msra.mxu0 0.0
  %483 = vmatprep.subr.mxu0 0.0
  %484 = vmatpush1.msra.mxu0 0.0
  %485 = vmatprep.subr.mxu0 0.0
  %486 = vmatpush1.msra.mxu0 0.0
  %487 = vmatprep.subr.mxu0 0.0
  %488 = vmatpush1.msra.mxu0 0.0
  %489 = vmatprep.subr.mxu0 0.0
  %490 = vmatpush1.msra.mxu0 0.0
  %491 = vmatprep.subr.mxu0 0.0
  %492 = vmatpush1.msra.mxu0 0.0
  %493 = vmatprep.subr.mxu0 0.0
  %494 = vmatpush1.msra.mxu0 0.0
  %495 = vmatprep.subr.mxu0 0.0
  %496 = vmatpush1.msra.mxu0 0.0
  %497 = vmatprep.subr.mxu0 0.0
  %498 = vmatpush1.msra.mxu0 0.0
  %499 = vmatprep.subr.mxu0 0.0
  %500 = vmatpush1.msra.mxu0 0.0
  %501 = vmatprep.subr.mxu0 0.0
  %502 = vmatpush1.msra.mxu0 0.0
  %503 = vmatprep.mubr.f32.mxu0 0.0
  %504 = vmatmul.mubr.f32.gmra.mrb[0].mxu0 %v413
  %v505 = vpop.f32.mrb[0].mxu0
  %v506 = vadd.f32 %v437, %v505
  %v507 = vpop.f32.mrb[0].mxu0
  %508 = vdwg.mxu0
  %509 = vst [vmem:[%s5] sm:$0xff] %v506
  // Predicated region
  $region22: #{convnet_forward.5} parent=0 // pred_check
    _
  $region23: #{convnet_forward.5} parent=0 // pred_check_branch
    %511 = sbr.rel (0) target = $region25
  $region24: #{convnet_forward.5} parent=0 // pred_region
    _
  $region25: #{convnet_forward.5} parent=0 // pred_fallthru
    _
  // Predicated region
  $region26: #{convnet_forward.5} parent=0 // pred_check
    _
  $region27: #{convnet_forward.5} parent=0 // pred_check_branch
    %513 = sbr.rel (0) target = $region29
  $region28: #{convnet_forward.5} parent=0 // pred_region
    _
  $region29: #{convnet_forward.5} parent=0 // pred_fallthru
    _

</llo_original>
